<compile_context>
chip_gen: v7x
topology: tpu7x:2x2x1
jax: 0.10.0
libtpu: 0.0.40
codegen_flags: <defaults>
</compile_context>

<pallas_src>
import jax
import jax.numpy as jnp
from jax.experimental import pallas as pl
from jax.experimental.pallas import tpu as pltpu


def _cdiv(a, b):
    return -(-a // b)


def _fused_block_linear_kernel(bid_ref, x_ref, w_ref, o_ref):
    # bid_ref: scalar-prefetched (SMEM) per-tile block id -- consumed by index_maps only.
    # x_ref:   (TILE_N, nfeat) row tile (streamed, double-buffered)
    # w_ref:   (1, nfeat, nout) folded weight of the block owning this tile (tiny, VMEM)
    # o_ref:   (TILE_N, nout)
    del bid_ref
    w = w_ref[0]  # (nfeat, nout)
    o_ref[...] = jnp.dot(
        x_ref[...], w, preferred_element_type=jnp.float32
    ).astype(o_ref.dtype)


def fused_block_linear(x_rows, w_stacked, tile_block_id, *, tile_n):
    """y[r] = x_rows[r] @ w_stacked[block_of_tile(r)] for all rows, in ONE pallas_call.

    x_rows:        (n_rows_pad, nfeat), n_rows_pad a multiple of tile_n and every row tile
                   belonging to exactly one block (blocks are padded to tile boundaries).
    w_stacked:     (n_blocks, nfeat, nout) folded per-block weights.
    tile_block_id: (n_rows_pad // tile_n,) int32 block index of each row tile.
    """
    n_rows_pad, nfeat = x_rows.shape
    n_blocks, _, nout = w_stacked.shape
    n_tiles = n_rows_pad // tile_n
    assert n_tiles * tile_n == n_rows_pad
    assert int(tile_block_id.shape[0]) == n_tiles

    itemsize = jnp.dtype(x_rows.dtype).itemsize
    cost = pl.CostEstimate(
        flops=int(2 * n_rows_pad * nfeat * nout),
        transcendentals=0,
        bytes_accessed=int(
            n_rows_pad * nfeat * itemsize          # x stream (dominant)
            + n_rows_pad * nout * itemsize         # y
            + n_blocks * nfeat * nout * itemsize   # weights
        ),
    )

    grid_spec = pltpu.PrefetchScalarGridSpec(
        num_scalar_prefetch=1,
        grid=(n_tiles,),
        in_specs=[
            # Row tiles stream HBM->VMEM, pipelined/double-buffered by Pallas.
            pl.BlockSpec((tile_n, nfeat), lambda i, bid: (i, 0)),
            # Folded weights of the block owning tile i (re-DMA'd only when bid changes).
            pl.BlockSpec((1, nfeat, nout), lambda i, bid: (bid[i], 0, 0)),
        ],
        # NOTE: output last dim is nout (typically 1) -> masked single-lane stores, but the
        # store stream is nfeat x smaller than the input stream, so the kernel stays
        # input-DMA-bound; a lane-dense repack would add an in-kernel layout shuffle for
        # no measurable gain at these shapes.
        out_specs=pl.BlockSpec((tile_n, nout), lambda i, bid: (i, 0)),
    )

    return pl.pallas_call(
        _fused_block_linear_kernel,
        out_shape=jax.ShapeDtypeStruct((n_rows_pad, nout), x_rows.dtype),
        grid_spec=grid_spec,
        compiler_params=pltpu.CompilerParams(
            # Row tiles are fully independent -> shard across TensorCores (2x on v7x).
            dimension_semantics=("parallel",),
        ),
        cost_estimate=cost,
    )(tile_block_id, x_rows, w_stacked)


class LinearModelPeriodicPallas:
    """JAX/Pallas re-implementation of LinearModelPeriodic's forward (prediction) pass.

    One MLP per target-block key, defaults matching the PyTorch module
    (nlayers=2, nhidden=16, nout=nprop, activation=None, bias=False):
        submodel(x) = x @ W1.T @ W2.T @ W3.T   applied along the last (feature) axis.
    Since that chain is exactly linear, it is folded once into w_eff (nfeat, nout);
    forward() then evaluates every block with a single batched Pallas kernel per
    (nfeat, nout) group and reshapes back to (nsamples, ncomp, nout) like the reference.
    """

    def __init__(self, block_specs, nhidden=16, nlayers=2, seed=0,
                 dtype=jnp.float32, tile_n=2048):
        # tile_n sizing: 2 (double-buffer) * tile_n * nfeat * 4 B must stay well under the
        # ~32 MiB scoped-VMEM default (v7x has only 64 MiB physical VMEM).  tile_n=2048 is
        # safe up to nfeat ~ 2000; raise it on v5e/v6e for small nfeat to amortize the
        # ~0.35 us/grid-step overhead.
        assert nlayers == 2, "module default: weight chain is [nin->nh, nh->nh, nh->nout]"
        self.block_specs = dict(block_specs)
        self.tile_n = int(tile_n)
        self.dtype = dtype

        self.params = {}   # key -> (w1, w2, w3), stored as (in, out) = torch weight.T
        self.w_eff = {}    # key -> folded (nfeat, nout) effective weight
        key = jax.random.PRNGKey(seed)
        for bk, spec in self.block_specs.items():
            nfeat = spec["nfeat"]
            nout = spec.get("nout", 1)
            key, k1, k2, k3 = jax.random.split(key, 4)
            w1 = jax.random.normal(k1, (nfeat, nhidden), dtype) / jnp.sqrt(nfeat)
            w2 = jax.random.normal(k2, (nhidden, nhidden), dtype) / jnp.sqrt(nhidden)
            w3 = jax.random.normal(k3, (nhidden, nout), dtype) / jnp.sqrt(nhidden)
            self.params[bk] = (w1, w2, w3)
            # activation=None / bias=False -> exactly linear; fold once (bit-equivalent up
            # to f32 rounding).
            self.w_eff[bk] = ((w1 @ w2) @ w3).astype(dtype)

        # Group blocks that share (nfeat, nout) so each group is one pallas_call with a
        # stacked weight tensor + scalar-prefetched per-tile block ids.
        self._groups = {}
        for bk, spec in self.block_specs.items():
            sig = (spec["nfeat"], spec.get("nout", 1))
            self._groups.setdefault(sig, []).append(bk)
        self._group_w = {
            sig: jnp.stack([self.w_eff[bk] for bk in keys])   # (n_blocks, nfeat, nout)
            for sig, keys in self._groups.items()
        }

    def forward(self, features, return_type="coupled_blocks"):
        # features: dict key -> array (nsamples, ncomp, nfeat), like TensorBlock.values
        assert return_type == "coupled_blocks"
        # TODO(synk): model_return(return_matrix=True) (_to_uncoupled_basis / _to_matrix over
        # cell shifts) and the metatensor TensorMap/Labels sample-matching bookkeeping have
        # no Pallas equivalent here; only the per-block MLP prediction path is implemented.
        tile_n = self.tile_n
        pred_blocks = {}
        for (nfeat, nout), keys in self._groups.items():
            w_stacked = self._group_w[(nfeat, nout)]
            xs, tile_ids, meta = [], [], []
            row0 = 0
            for bi, bk in enumerate(keys):
                feat = features[bk]
                nsamples, ncomp, nf = feat.shape
                assert nf == nfeat
                rows = nsamples * ncomp
                n_tiles_b = max(1, _cdiv(rows, tile_n))
                rows_pad = n_tiles_b * tile_n
                x2d = jnp.reshape(feat, (rows, nfeat)).astype(self.dtype)
                if rows_pad != rows:
                    # One pad per block so every row tile belongs to exactly one block;
                    # padded rows produce garbage-free zeros that are sliced away below.
                    x2d = jnp.pad(x2d, ((0, rows_pad - rows), (0, 0)))
                xs.append(x2d)
                tile_ids += [bi] * n_tiles_b
                meta.append((bk, nsamples, ncomp, nout, row0, rows))
                row0 += rows_pad

            x_rows = xs[0] if len(xs) == 1 else jnp.concatenate(xs, axis=0)
            tile_block_id = jnp.asarray(tile_ids, dtype=jnp.int32)
            out = fused_block_linear(x_rows, w_stacked, tile_block_id, tile_n=tile_n)

            for bk, nsamples, ncomp, nout_b, start, rows in meta:
                pred_blocks[bk] = out[start:start + rows].reshape(nsamples, ncomp, nout_b)
        return pred_blocks


def _reference_forward(features, params):
    # Plain-JAX reference of the UNFUSED torch MLP chain: ((x @ W1) @ W2) @ W3.
    out = {}
    for bk, feat in features.items():
        w1, w2, w3 = params[bk]
        out[bk] = ((feat @ w1) @ w2) @ w3
    return out


if __name__ == "__main__":
    key = jax.random.PRNGKey(0)

    # Small synthetic stand-in for the metatensor feature TensorMap: three target blocks
    # with L = 0, 1, 2 (ncomp = 2L+1), 8 samples each, 32-dim features, nprop = 1.
    nsamples, nfeat = 8, 32
    block_specs = {
        "(8, 8, 0)": {"nsamples": nsamples, "ncomp": 1, "nfeat": nfeat, "nout": 1},
        "(8, 8, 1)": {"nsamples": nsamples, "ncomp": 3, "nfeat": nfeat, "nout": 1},
        "(8, 8, 2)": {"nsamples": nsamples, "ncomp": 5, "nfeat": nfeat, "nout": 1},
    }

    features = {}
    for bk, spec in block_specs.items():
        key, sub = jax.random.split(key)
        features[bk] = jax.random.normal(
            sub, (spec["nsamples"], spec["ncomp"], spec["nfeat"]), jnp.float32
        )

    model = LinearModelPeriodicPallas(block_specs, nhidden=16, nlayers=2, seed=0)

    preds = model.forward(features, return_type="coupled_blocks")
    preds = jax.tree_util.tree_map(jax.block_until_ready, preds)

    # Numerical check against the unfused plain-JAX chain (same semantics as the torch MLP).
    ref = _reference_forward(features, model.params)
    for bk, spec in block_specs.items():
        assert preds[bk].shape == (spec["nsamples"], spec["ncomp"], spec["nout"]), bk
        assert jnp.allclose(preds[bk], ref[bk], atol=1e-4, rtol=1e-4), bk

    print("KERNEL_OK")
</pallas_src>

<mosaic_0001>
module attributes {stable_mosaic.version = 11 : i64} {
  func.func @_fused_block_linear_kernel(%arg0: i32, %arg1: memref<3xi32, #tpu.memory_space<smem>>, %arg2: memref<2048x32xf32, #tpu.memory_space<vmem>>, %arg3: memref<1x32x1xf32, #tpu.memory_space<vmem>>, %arg4: memref<2048x1xf32, #tpu.memory_space<vmem>>) attributes {dimension_semantics = [#tpu.dimension_semantics<parallel>], iteration_bounds = array<i64: 3>, scalar_prefetch = 1 : i64, scratch_operands = 0 : i64, tpu.core_type = #tpu.core_type<tc>, window_params = [{transform_indices = @transform_0, window_bounds = array<i64: 2048, 32>}, {transform_indices = @transform_1, window_bounds = array<i64: 1, 32, 1>}, {transform_indices = @transform_2, window_bounds = array<i64: 2048, 1>}]} {
    %c0 = arith.constant 0 : index
    %c0_0 = arith.constant 0 : index
    %c0_1 = arith.constant 0 : index
    %0 = vector.load %arg3[%c0, %c0_0, %c0_1] : memref<1x32x1xf32, #tpu.memory_space<vmem>>, vector<1x32x1xf32>
    %1 = vector.shape_cast %0 : vector<1x32x1xf32> to vector<32x1xf32>
    %c0_2 = arith.constant 0 : index
    %c0_3 = arith.constant 0 : index
    %2 = vector.load %arg2[%c0_2, %c0_3] : memref<2048x32xf32, #tpu.memory_space<vmem>>, vector<2048x32xf32>
    %cst = arith.constant dense<0.000000e+00> : vector<2048x1xf32>
    %3 = tpu.matmul %2, %1, %cst {dimension_numbers = #tpu.dot_dimension_numbers<[1], [0], [0], [1], [0, 0, 1, 1], [], []>} : vector<2048x32xf32>, vector<32x1xf32>, vector<2048x1xf32> -> vector<2048x1xf32>
    %c0_4 = arith.constant 0 : index
    %c0_5 = arith.constant 0 : index
    %4 = vector.load %arg4[%c0_4, %c0_5] : memref<2048x1xf32, #tpu.memory_space<vmem>>, vector<2048x1xf32>
    tpu.vector_store %arg4[%c0_4, %c0_5], %3 {strides = array<i32>} : memref<2048x1xf32, #tpu.memory_space<vmem>>, vector<2048x1xf32>,
    return
  }
  func.func @transform_0(%arg0: i32, %arg1: memref<3xi32, #tpu.memory_space<smem>>) -> (i32, i32) {
    %c0_i32 = arith.constant 0 : i32
    %c0_i32_0 = arith.constant 0 : i32
    return %arg0, %c0_i32 : i32, i32
  }
  func.func @transform_1(%arg0: i32, %arg1: memref<3xi32, #tpu.memory_space<smem>>) -> (i32, i32, i32) {
    %0 = arith.index_cast %arg0 : i32 to index
    %1 = memref.load %arg1[%0] : memref<3xi32, #tpu.memory_space<smem>>
    %c0_i32 = arith.constant 0 : i32
    %c0_i32_0 = arith.constant 0 : i32
    %c0_i32_1 = arith.constant 0 : i32
    return %1, %c0_i32, %c0_i32_0 : i32, i32, i32
  }
  func.func @transform_2(%arg0: i32, %arg1: memref<3xi32, #tpu.memory_space<smem>>) -> (i32, i32) {
    %c0_i32 = arith.constant 0 : i32
    %c0_i32_0 = arith.constant 0 : i32
    return %arg0, %c0_i32 : i32, i32
  }
}

</mosaic_0001>

<llo_original>
// kernel: tpu_custom_call.1
$region0: #{tpu_custom_call.1}
  #allocation0 [shape = 'u32[]', space=smem, size = 0x4, offset = 0x4, fixed_abs, tag = 'smem constant byte address 0x4 - core index']
  #allocation1 [shape = 'u32[144,128]{1,0:T(1,128)}', space=vmem, size = 0x12000, scoped, tag = 'internal scratch']
  #allocation2 [shape = 's32[1]{0}', space=sflag, size = 0x4, scoped, tag = 'scoped memory for tpu_custom_call.1']
  #allocation3 [shape = 'u8[512]{0}', space=smem, size = 0x200, scoped, tag = 'prefetched SMEM operand 0']
  %s0 = inlined_call_operand.vmem [shape: s32[3], index: 0, kind: input, shape index: {}]
  %s1 = inlined_call_operand.vmem [shape: f32[6144,32], index: 1, kind: input, shape index: {}]
  %s2 = inlined_call_operand.vmem [shape: f32[3,32,1], index: 2, kind: input, shape index: {}]
  %s3 = inlined_call_operand.vmem [shape: f32[6144,1], index: 3, kind: output, shape index: {}]
  %s4 = sld [smem:[#allocation0]]
  $region41: #{tpu_custom_call.1} parent=0
    _
  %s6 = ssub.s32 1, %s4
  %s7 = scalar_select 0, %s6, %s4
  %s8 = sshll.u32 %s0, 4
  %s9 = int_to_ptr.vmem [resolvable:$true] %s8
  %11 = dma.vmem_to_smem %s9, 16, [#allocation3], [#allocation2]
  %12 = dma.done [#allocation2], 16
  %13 = sfence
  loop: start=0, step=1, limit=5
  $region2: #{tpu_custom_call.1} parent=0 // loop_pre_header
    _
  $region3: #{tpu_custom_call.1} parent=0 // loop_header
    %s15 = sphi 0, %s19
    %p16 = scmp.ge.s32.totalorder %s15, 5
    %s25 = sphi 0, %s27
    %s28 = sphi 0, %s25
    %s29 = sphi 0, %s28
    %s45 = sphi 0, %s29
    %s53 = sphi 0, %s55
    %s56 = sphi 0, %s53
    %s57 = sphi 0, %s56
    %s73 = sphi 0, %s57
    %s79 = sphi 0, %s81
    %s82 = sphi 0, %s79
    %s83 = sphi 0, %s82
    %s99 = sphi 0, %s83
  $region4: #{tpu_custom_call.1} parent=0 // loop_header_branch
    %18 = sbr.rel (%p16) target = $region8
  $region5: #{tpu_custom_call.1} parent=0 // loop_body
    %s20 = ssub.s32 %s15, 1
    %s21 = ssub.s32 %s15, 2
    %s22 = sadd.s32 %s15, 1
    %s23 = ssub.s32 %s15, %s22
    %p24 = scmp.eq.s32.totalorder %s23, 0
    %s26 = sadd.s32 %s25, 1
    %s27 = scalar_select %p24, %s25, %s26
    %p30 = pneg %p24
    %p31 = scmp.eq.s32.totalorder %s15, 2
    %p32 = por %p30, %p31
    %p33 = scmp.ne.s32.totalorder %s25, %s28
    %p34 = scmp.eq.s32.totalorder %s15, 0
    %p35 = por %p33, %p34
    %p36 = scmp.ne.s32.totalorder %s25, %s28
    %p37 = scmp.eq.s32.totalorder %s20, 2
    %p38 = por %p36, %p37
    %p39 = scmp.ne.s32.totalorder %s28, %s29
    %p40 = scmp.eq.s32.totalorder %s20, 0
    %p41 = por %p39, %p40
    %p42 = scmp.ne.s32.totalorder %s28, %s29
    %p43 = scmp.eq.s32.totalorder %s21, 2
    %p44 = por %p42, %p43
    %p46 = scmp.ne.s32.totalorder %s29, %s45
    %p47 = scmp.eq.s32.totalorder %s21, 0
    %p48 = por %p46, %p47
    %s49 = sld [smem:[#allocation3 + %s15]]
    %s50 = sld [smem:[#allocation3 + %s22]]
    %s51 = ssub.s32 %s49, %s50
    %p52 = scmp.eq.s32.totalorder %s51, 0
    %s54 = sadd.s32 %s53, 1
    %s55 = scalar_select %p52, %s53, %s54
    %p58 = pneg %p52
    %p59 = scmp.eq.s32.totalorder %s15, 2
    %p60 = por %p58, %p59
    %p61 = scmp.ne.s32.totalorder %s53, %s56
    %p62 = scmp.eq.s32.totalorder %s15, 0
    %p63 = por %p61, %p62
    %p64 = scmp.ne.s32.totalorder %s53, %s56
    %p65 = scmp.eq.s32.totalorder %s20, 2
    %p66 = por %p64, %p65
    %p67 = scmp.ne.s32.totalorder %s56, %s57
    %p68 = scmp.eq.s32.totalorder %s20, 0
    %p69 = por %p67, %p68
    %p70 = scmp.ne.s32.totalorder %s56, %s57
    %p71 = scmp.eq.s32.totalorder %s21, 2
    %p72 = por %p70, %p71
    %p74 = scmp.ne.s32.totalorder %s57, %s73
    %p75 = scmp.eq.s32.totalorder %s21, 0
    %p76 = por %p74, %p75
    %s77 = ssub.s32 %s15, %s22
    %p78 = scmp.eq.s32.totalorder %s77, 0
    %s80 = sadd.s32 %s79, 1
    %s81 = scalar_select %p78, %s79, %s80
    %p84 = pneg %p78
    %p85 = scmp.eq.s32.totalorder %s15, 2
    %p86 = por %p84, %p85
    %p87 = scmp.ne.s32.totalorder %s79, %s82
    %p88 = scmp.eq.s32.totalorder %s15, 0
    %p89 = por %p87, %p88
    %p90 = scmp.ne.s32.totalorder %s79, %s82
    %p91 = scmp.eq.s32.totalorder %s20, 2
    %p92 = por %p90, %p91
    %p93 = scmp.ne.s32.totalorder %s82, %s83
    %p94 = scmp.eq.s32.totalorder %s20, 0
    %p95 = por %p93, %p94
    %p96 = scmp.ne.s32.totalorder %s82, %s83
    %p97 = scmp.eq.s32.totalorder %s21, 2
    %p98 = por %p96, %p97
    %p100 = scmp.ne.s32.totalorder %s83, %s99
    %p101 = scmp.eq.s32.totalorder %s21, 0
    %p102 = por %p100, %p101
    %p103 = scmp.le.s32.totalorder 1, %s15
    %p104 = scmp.lt.s32.totalorder %s15, 4
    %p105 = pnand %p103, %p104
    %p106 = pneg %p105
    // Predicated region
    $region9: #{tpu_custom_call.1} parent=5 // pred_check
      _
    $region10: #{tpu_custom_call.1} parent=5 // pred_check_branch
      %108 = sbr.rel (%p105) target = $region12
    $region11: #{tpu_custom_call.1} parent=5 // pred_region
      %s109 = ssub.s32 %s15, 1
    $region12: #{tpu_custom_call.1} parent=5 // pred_fallthru
      _
    %p110 = scmp.lt.s32.totalorder %s15, 3
    // Predicated region
    $region13: #{tpu_custom_call.1} parent=5 // pred_check
      %p111 = pneg %p110
    $region14: #{tpu_custom_call.1} parent=5 // pred_check_branch
      %113 = sbr.rel (%p111) target = $region16
    $region15: #{tpu_custom_call.1} parent=5 // pred_region
      // Predicated region
      $region17: #{tpu_custom_call.1} parent=15 // pred_check
        %p114 = pneg %p35
      $region18: #{tpu_custom_call.1} parent=15 // pred_check_branch
        %116 = sbr.rel (%p114) target = $region20
      $region19: #{tpu_custom_call.1} parent=15 // pred_region
        %s117 = smul.u32 256, %s15
        %p118 = scmp.lt.s32.totalorder %s117, 767
        %s119 = scalar_select %p118, %s117, 767
        %s120 = smul.addr %s119, 8
        %s121 = scalar_lea.vmem %s1, %s120
        %s122 = smul.u32 256, %s15
      $region20: #{tpu_custom_call.1} parent=15 // pred_fallthru
        _
      // Predicated region
      $region21: #{tpu_custom_call.1} parent=15 // pred_check
        %p123 = pneg %p63
      $region22: #{tpu_custom_call.1} parent=15 // pred_check_branch
        %125 = sbr.rel (%p123) target = $region24
      $region23: #{tpu_custom_call.1} parent=15 // pred_region
        %s126 = sld [smem:[#allocation3 + %s15]]
        %p127 = scmp.lt.s32.totalorder %s126, 2
        %s128 = scalar_select %p127, %s126, 2
        %s129 = smul.addr %s128, 4
        %s130 = smul.addr %s129, 8
        %s131 = scalar_lea.vmem %s2, %s130
        %s132 = sld [smem:[#allocation3 + %s15]]
      $region24: #{tpu_custom_call.1} parent=15 // pred_fallthru
        _
    $region16: #{tpu_custom_call.1} parent=5 // pred_fallthru
      _
    %p133 = scmp.le.s32.totalorder 1, %s15
    %p134 = scmp.lt.s32.totalorder %s15, 4
    %p135 = pnand %p133, %p134
    %p136 = pneg %p135
    // Predicated region
    $region25: #{tpu_custom_call.1} parent=5 // pred_check
      _
    $region26: #{tpu_custom_call.1} parent=5 // pred_check_branch
      %138 = sbr.rel (%p135) target = $region28
    $region27: #{tpu_custom_call.1} parent=5 // pred_region
      %s139 = ssub.s32 %s15, 1
      %s140 = smul.u32 256, %s20
      %p141 = scmp.lt.s32.totalorder %s140, 767
      %s142 = scalar_select %p141, %s140, 767
      %s143 = smul.addr %s142, 8
      %s144 = scalar_lea.vmem %s1, %s143
      %p145 = pneg %p41
      %p146 = pneg %p38
      %s147 = sld [smem:[#allocation3 + %s20]]
      %p148 = scmp.lt.s32.totalorder %s147, 2
      %s149 = scalar_select %p148, %s147, 2
      %s150 = smul.addr %s149, 4
      %s151 = smul.addr %s150, 8
      %s152 = scalar_lea.vmem %s2, %s151
      %p153 = pneg %p69
      %p154 = pneg %p66
      %p155 = pneg %p95
      %p156 = pneg %p92
      %s157 = smul.u32 256, %s20
      %p158 = scmp.lt.s32.totalorder %s157, 767
      %s159 = scalar_select %p158, %s157, 767
      %s160 = smul.addr %s159, 8
      %s161 = scalar_lea.vmem %s3, %s160
      %s162 = smul.u32 256, %s20
      %p163 = scmp.lt.s32.totalorder %s162, 767
      %s164 = scalar_select %p163, %s162, 767
      %s165 = smul.addr %s164, 8
      %s166 = scalar_lea.vmem %s1, %s165
      %s167 = smul.u32 256, %s20
      %s168 = sld [smem:[#allocation3 + %s20]]
      %p169 = scmp.lt.s32.totalorder %s168, 2
      %s170 = scalar_select %p169, %s168, 2
      %s171 = smul.addr %s170, 4
      %s172 = smul.addr %s171, 8
      %s173 = scalar_lea.vmem %s2, %s172
      %s174 = sld [smem:[#allocation3 + %s20]]
      %s175 = smul.u32 256, %s20
      %p176 = scmp.lt.s32.totalorder %s175, 767
      %s177 = scalar_select %p176, %s175, 767
      %s178 = smul.addr %s177, 8
      %s179 = scalar_lea.vmem %s3, %s178
      %s180 = smul.u32 256, %s20
      %v181 = vld [vmem:[%s173] sm:$0xff]
      %v182 = vld [vmem:[%s173 + $0x8] sm:$0xff]
      %v183 = vld [vmem:[%s173 + $0x10] sm:$0xff]
      %v184 = vld [vmem:[%s173 + $0x18] sm:$0xff]
      %v185 = vld [vmem:[%s166] sm:$0xff]
      %v186 = vld [vmem:[%s166 + $0x8] sm:$0xff]
      %v187 = vld [vmem:[%s166 + $0x10] sm:$0xff]
      %v188 = vld [vmem:[%s166 + $0x18] sm:$0xff]
      %v189 = vld [vmem:[%s166 + $0x20] sm:$0xff]
      %v190 = vld [vmem:[%s166 + $0x28] sm:$0xff]
      %v191 = vld [vmem:[%s166 + $0x30] sm:$0xff]
      %v192 = vld [vmem:[%s166 + $0x38] sm:$0xff]
      %v193 = vld [vmem:[%s166 + $0x40] sm:$0xff]
      %v194 = vld [vmem:[%s166 + $0x48] sm:$0xff]
      %v195 = vld [vmem:[%s166 + $0x50] sm:$0xff]
      %v196 = vld [vmem:[%s166 + $0x58] sm:$0xff]
      %v197 = vld [vmem:[%s166 + $0x60] sm:$0xff]
      %v198 = vld [vmem:[%s166 + $0x68] sm:$0xff]
      %v199 = vld [vmem:[%s166 + $0x70] sm:$0xff]
      %v200 = vld [vmem:[%s166 + $0x78] sm:$0xff]
      %v201 = vld [vmem:[%s166 + $0x80] sm:$0xff]
      %v202 = vld [vmem:[%s166 + $0x88] sm:$0xff]
      %v203 = vld [vmem:[%s166 + $0x90] sm:$0xff]
      %v204 = vld [vmem:[%s166 + $0x98] sm:$0xff]
      %v205 = vld [vmem:[%s166 + $0xa0] sm:$0xff]
      %v206 = vld [vmem:[%s166 + $0xa8] sm:$0xff]
      %v207 = vld [vmem:[%s166 + $0xb0] sm:$0xff]
      %v208 = vld [vmem:[%s166 + $0xb8] sm:$0xff]
      %v209 = vld [vmem:[%s166 + $0xc0] sm:$0xff]
      %v210 = vld [vmem:[%s166 + $0xc8] sm:$0xff]
      %v211 = vld [vmem:[%s166 + $0xd0] sm:$0xff]
      %v212 = vld [vmem:[%s166 + $0xd8] sm:$0xff]
      %v213 = vld [vmem:[%s166 + $0xe0] sm:$0xff]
      %v214 = vld [vmem:[%s166 + $0xe8] sm:$0xff]
      %v215 = vld [vmem:[%s166 + $0xf0] sm:$0xff]
      %v216 = vld [vmem:[%s166 + $0xf8] sm:$0xff]
      %v217 = vld [vmem:[%s166 + $0x100] sm:$0xff]
      %v218 = vld [vmem:[%s166 + $0x108] sm:$0xff]
      %v219 = vld [vmem:[%s166 + $0x110] sm:$0xff]
      %v220 = vld [vmem:[%s166 + $0x118] sm:$0xff]
      %v221 = vld [vmem:[%s166 + $0x120] sm:$0xff]
      %v222 = vld [vmem:[%s166 + $0x128] sm:$0xff]
      %v223 = vld [vmem:[%s166 + $0x130] sm:$0xff]
      %v224 = vld [vmem:[%s166 + $0x138] sm:$0xff]
      %v225 = vld [vmem:[%s166 + $0x140] sm:$0xff]
      %v226 = vld [vmem:[%s166 + $0x148] sm:$0xff]
      %v227 = vld [vmem:[%s166 + $0x150] sm:$0xff]
      %v228 = vld [vmem:[%s166 + $0x158] sm:$0xff]
      %v229 = vld [vmem:[%s166 + $0x160] sm:$0xff]
      %v230 = vld [vmem:[%s166 + $0x168] sm:$0xff]
      %v231 = vld [vmem:[%s166 + $0x170] sm:$0xff]
      %v232 = vld [vmem:[%s166 + $0x178] sm:$0xff]
      %v233 = vld [vmem:[%s166 + $0x180] sm:$0xff]
      %v234 = vld [vmem:[%s166 + $0x188] sm:$0xff]
      %v235 = vld [vmem:[%s166 + $0x190] sm:$0xff]
      %v236 = vld [vmem:[%s166 + $0x198] sm:$0xff]
      %v237 = vld [vmem:[%s166 + $0x1a0] sm:$0xff]
      %v238 = vld [vmem:[%s166 + $0x1a8] sm:$0xff]
      %v239 = vld [vmem:[%s166 + $0x1b0] sm:$0xff]
      %v240 = vld [vmem:[%s166 + $0x1b8] sm:$0xff]
      %v241 = vld [vmem:[%s166 + $0x1c0] sm:$0xff]
      %v242 = vld [vmem:[%s166 + $0x1c8] sm:$0xff]
      %v243 = vld [vmem:[%s166 + $0x1d0] sm:$0xff]
      %v244 = vld [vmem:[%s166 + $0x1d8] sm:$0xff]
      %v245 = vld [vmem:[%s166 + $0x1e0] sm:$0xff]
      %v246 = vld [vmem:[%s166 + $0x1e8] sm:$0xff]
      %v247 = vld [vmem:[%s166 + $0x1f0] sm:$0xff]
      %v248 = vld [vmem:[%s166 + $0x1f8] sm:$0xff]
      %v249 = vld [vmem:[%s166 + $0x200] sm:$0xff]
      %v250 = vld [vmem:[%s166 + $0x208] sm:$0xff]
      %v251 = vld [vmem:[%s166 + $0x210] sm:$0xff]
      %v252 = vld [vmem:[%s166 + $0x218] sm:$0xff]
      %v253 = vld [vmem:[%s166 + $0x220] sm:$0xff]
      %v254 = vld [vmem:[%s166 + $0x228] sm:$0xff]
      %v255 = vld [vmem:[%s166 + $0x230] sm:$0xff]
      %v256 = vld [vmem:[%s166 + $0x238] sm:$0xff]
      %v257 = vld [vmem:[%s166 + $0x240] sm:$0xff]
      %v258 = vld [vmem:[%s166 + $0x248] sm:$0xff]
      %v259 = vld [vmem:[%s166 + $0x250] sm:$0xff]
      %v260 = vld [vmem:[%s166 + $0x258] sm:$0xff]
      %v261 = vld [vmem:[%s166 + $0x260] sm:$0xff]
      %v262 = vld [vmem:[%s166 + $0x268] sm:$0xff]
      %v263 = vld [vmem:[%s166 + $0x270] sm:$0xff]
      %v264 = vld [vmem:[%s166 + $0x278] sm:$0xff]
      %v265 = vld [vmem:[%s166 + $0x280] sm:$0xff]
      %v266 = vld [vmem:[%s166 + $0x288] sm:$0xff]
      %v267 = vld [vmem:[%s166 + $0x290] sm:$0xff]
      %v268 = vld [vmem:[%s166 + $0x298] sm:$0xff]
      %v269 = vld [vmem:[%s166 + $0x2a0] sm:$0xff]
      %v270 = vld [vmem:[%s166 + $0x2a8] sm:$0xff]
      %v271 = vld [vmem:[%s166 + $0x2b0] sm:$0xff]
      %v272 = vld [vmem:[%s166 + $0x2b8] sm:$0xff]
      %v273 = vld [vmem:[%s166 + $0x2c0] sm:$0xff]
      %v274 = vld [vmem:[%s166 + $0x2c8] sm:$0xff]
      %v275 = vld [vmem:[%s166 + $0x2d0] sm:$0xff]
      %v276 = vld [vmem:[%s166 + $0x2d8] sm:$0xff]
      %v277 = vld [vmem:[%s166 + $0x2e0] sm:$0xff]
      %v278 = vld [vmem:[%s166 + $0x2e8] sm:$0xff]
      %v279 = vld [vmem:[%s166 + $0x2f0] sm:$0xff]
      %v280 = vld [vmem:[%s166 + $0x2f8] sm:$0xff]
      %v281 = vld [vmem:[%s166 + $0x300] sm:$0xff]
      %v282 = vld [vmem:[%s166 + $0x308] sm:$0xff]
      %v283 = vld [vmem:[%s166 + $0x310] sm:$0xff]
      %v284 = vld [vmem:[%s166 + $0x318] sm:$0xff]
      %v285 = vld [vmem:[%s166 + $0x320] sm:$0xff]
      %v286 = vld [vmem:[%s166 + $0x328] sm:$0xff]
      %v287 = vld [vmem:[%s166 + $0x330] sm:$0xff]
      %v288 = vld [vmem:[%s166 + $0x338] sm:$0xff]
      %v289 = vld [vmem:[%s166 + $0x340] sm:$0xff]
      %v290 = vld [vmem:[%s166 + $0x348] sm:$0xff]
      %v291 = vld [vmem:[%s166 + $0x350] sm:$0xff]
      %v292 = vld [vmem:[%s166 + $0x358] sm:$0xff]
      %v293 = vld [vmem:[%s166 + $0x360] sm:$0xff]
      %v294 = vld [vmem:[%s166 + $0x368] sm:$0xff]
      %v295 = vld [vmem:[%s166 + $0x370] sm:$0xff]
      %v296 = vld [vmem:[%s166 + $0x378] sm:$0xff]
      %v297 = vld [vmem:[%s166 + $0x380] sm:$0xff]
      %v298 = vld [vmem:[%s166 + $0x388] sm:$0xff]
      %v299 = vld [vmem:[%s166 + $0x390] sm:$0xff]
      %v300 = vld [vmem:[%s166 + $0x398] sm:$0xff]
      %v301 = vld [vmem:[%s166 + $0x3a0] sm:$0xff]
      %v302 = vld [vmem:[%s166 + $0x3a8] sm:$0xff]
      %v303 = vld [vmem:[%s166 + $0x3b0] sm:$0xff]
      %v304 = vld [vmem:[%s166 + $0x3b8] sm:$0xff]
      %v305 = vld [vmem:[%s166 + $0x3c0] sm:$0xff]
      %v306 = vld [vmem:[%s166 + $0x3c8] sm:$0xff]
      %v307 = vld [vmem:[%s166 + $0x3d0] sm:$0xff]
      %v308 = vld [vmem:[%s166 + $0x3d8] sm:$0xff]
      %v309 = vld [vmem:[%s166 + $0x3e0] sm:$0xff]
      %v310 = vld [vmem:[%s166 + $0x3e8] sm:$0xff]
      %v311 = vld [vmem:[%s166 + $0x3f0] sm:$0xff]
      %v312 = vld [vmem:[%s166 + $0x3f8] sm:$0xff]
      %v313 = vld [vmem:[%s166 + $0x400] sm:$0xff]
      %v314 = vld [vmem:[%s166 + $0x408] sm:$0xff]
      %v315 = vld [vmem:[%s166 + $0x410] sm:$0xff]
      %v316 = vld [vmem:[%s166 + $0x418] sm:$0xff]
      %v317 = vld [vmem:[%s166 + $0x420] sm:$0xff]
      %v318 = vld [vmem:[%s166 + $0x428] sm:$0xff]
      %v319 = vld [vmem:[%s166 + $0x430] sm:$0xff]
      %v320 = vld [vmem:[%s166 + $0x438] sm:$0xff]
      %v321 = vld [vmem:[%s166 + $0x440] sm:$0xff]
      %v322 = vld [vmem:[%s166 + $0x448] sm:$0xff]
      %v323 = vld [vmem:[%s166 + $0x450] sm:$0xff]
      %v324 = vld [vmem:[%s166 + $0x458] sm:$0xff]
      %v325 = vld [vmem:[%s166 + $0x460] sm:$0xff]
      %v326 = vld [vmem:[%s166 + $0x468] sm:$0xff]
      %v327 = vld [vmem:[%s166 + $0x470] sm:$0xff]
      %v328 = vld [vmem:[%s166 + $0x478] sm:$0xff]
      %v329 = vld [vmem:[%s166 + $0x480] sm:$0xff]
      %v330 = vld [vmem:[%s166 + $0x488] sm:$0xff]
      %v331 = vld [vmem:[%s166 + $0x490] sm:$0xff]
      %v332 = vld [vmem:[%s166 + $0x498] sm:$0xff]
      %v333 = vld [vmem:[%s166 + $0x4a0] sm:$0xff]
      %v334 = vld [vmem:[%s166 + $0x4a8] sm:$0xff]
      %v335 = vld [vmem:[%s166 + $0x4b0] sm:$0xff]
      %v336 = vld [vmem:[%s166 + $0x4b8] sm:$0xff]
      %v337 = vld [vmem:[%s166 + $0x4c0] sm:$0xff]
      %v338 = vld [vmem:[%s166 + $0x4c8] sm:$0xff]
      %v339 = vld [vmem:[%s166 + $0x4d0] sm:$0xff]
      %v340 = vld [vmem:[%s166 + $0x4d8] sm:$0xff]
      %v341 = vld [vmem:[%s166 + $0x4e0] sm:$0xff]
      %v342 = vld [vmem:[%s166 + $0x4e8] sm:$0xff]
      %v343 = vld [vmem:[%s166 + $0x4f0] sm:$0xff]
      %v344 = vld [vmem:[%s166 + $0x4f8] sm:$0xff]
      %v345 = vld [vmem:[%s166 + $0x500] sm:$0xff]
      %v346 = vld [vmem:[%s166 + $0x508] sm:$0xff]
      %v347 = vld [vmem:[%s166 + $0x510] sm:$0xff]
      %v348 = vld [vmem:[%s166 + $0x518] sm:$0xff]
      %v349 = vld [vmem:[%s166 + $0x520] sm:$0xff]
      %v350 = vld [vmem:[%s166 + $0x528] sm:$0xff]
      %v351 = vld [vmem:[%s166 + $0x530] sm:$0xff]
      %v352 = vld [vmem:[%s166 + $0x538] sm:$0xff]
      %v353 = vld [vmem:[%s166 + $0x540] sm:$0xff]
      %v354 = vld [vmem:[%s166 + $0x548] sm:$0xff]
      %v355 = vld [vmem:[%s166 + $0x550] sm:$0xff]
      %v356 = vld [vmem:[%s166 + $0x558] sm:$0xff]
      %v357 = vld [vmem:[%s166 + $0x560] sm:$0xff]
      %v358 = vld [vmem:[%s166 + $0x568] sm:$0xff]
      %v359 = vld [vmem:[%s166 + $0x570] sm:$0xff]
      %v360 = vld [vmem:[%s166 + $0x578] sm:$0xff]
      %v361 = vld [vmem:[%s166 + $0x580] sm:$0xff]
      %v362 = vld [vmem:[%s166 + $0x588] sm:$0xff]
      %v363 = vld [vmem:[%s166 + $0x590] sm:$0xff]
      %v364 = vld [vmem:[%s166 + $0x598] sm:$0xff]
      %v365 = vld [vmem:[%s166 + $0x5a0] sm:$0xff]
      %v366 = vld [vmem:[%s166 + $0x5a8] sm:$0xff]
      %v367 = vld [vmem:[%s166 + $0x5b0] sm:$0xff]
      %v368 = vld [vmem:[%s166 + $0x5b8] sm:$0xff]
      %v369 = vld [vmem:[%s166 + $0x5c0] sm:$0xff]
      %v370 = vld [vmem:[%s166 + $0x5c8] sm:$0xff]
      %v371 = vld [vmem:[%s166 + $0x5d0] sm:$0xff]
      %v372 = vld [vmem:[%s166 + $0x5d8] sm:$0xff]
      %v373 = vld [vmem:[%s166 + $0x5e0] sm:$0xff]
      %v374 = vld [vmem:[%s166 + $0x5e8] sm:$0xff]
      %v375 = vld [vmem:[%s166 + $0x5f0] sm:$0xff]
      %v376 = vld [vmem:[%s166 + $0x5f8] sm:$0xff]
      %v377 = vld [vmem:[%s166 + $0x600] sm:$0xff]
      %v378 = vld [vmem:[%s166 + $0x608] sm:$0xff]
      %v379 = vld [vmem:[%s166 + $0x610] sm:$0xff]
      %v380 = vld [vmem:[%s166 + $0x618] sm:$0xff]
      %v381 = vld [vmem:[%s166 + $0x620] sm:$0xff]
      %v382 = vld [vmem:[%s166 + $0x628] sm:$0xff]
      %v383 = vld [vmem:[%s166 + $0x630] sm:$0xff]
      %v384 = vld [vmem:[%s166 + $0x638] sm:$0xff]
      %v385 = vld [vmem:[%s166 + $0x640] sm:$0xff]
      %v386 = vld [vmem:[%s166 + $0x648] sm:$0xff]
      %v387 = vld [vmem:[%s166 + $0x650] sm:$0xff]
      %v388 = vld [vmem:[%s166 + $0x658] sm:$0xff]
      %v389 = vld [vmem:[%s166 + $0x660] sm:$0xff]
      %v390 = vld [vmem:[%s166 + $0x668] sm:$0xff]
      %v391 = vld [vmem:[%s166 + $0x670] sm:$0xff]
      %v392 = vld [vmem:[%s166 + $0x678] sm:$0xff]
      %v393 = vld [vmem:[%s166 + $0x680] sm:$0xff]
      %v394 = vld [vmem:[%s166 + $0x688] sm:$0xff]
      %v395 = vld [vmem:[%s166 + $0x690] sm:$0xff]
      %v396 = vld [vmem:[%s166 + $0x698] sm:$0xff]
      %v397 = vld [vmem:[%s166 + $0x6a0] sm:$0xff]
      %v398 = vld [vmem:[%s166 + $0x6a8] sm:$0xff]
      %v399 = vld [vmem:[%s166 + $0x6b0] sm:$0xff]
      %v400 = vld [vmem:[%s166 + $0x6b8] sm:$0xff]
      %v401 = vld [vmem:[%s166 + $0x6c0] sm:$0xff]
      %v402 = vld [vmem:[%s166 + $0x6c8] sm:$0xff]
      %v403 = vld [vmem:[%s166 + $0x6d0] sm:$0xff]
      %v404 = vld [vmem:[%s166 + $0x6d8] sm:$0xff]
      %v405 = vld [vmem:[%s166 + $0x6e0] sm:$0xff]
      %v406 = vld [vmem:[%s166 + $0x6e8] sm:$0xff]
      %v407 = vld [vmem:[%s166 + $0x6f0] sm:$0xff]
      %v408 = vld [vmem:[%s166 + $0x6f8] sm:$0xff]
      %v409 = vld [vmem:[%s166 + $0x700] sm:$0xff]
      %v410 = vld [vmem:[%s166 + $0x708] sm:$0xff]
      %v411 = vld [vmem:[%s166 + $0x710] sm:$0xff]
      %v412 = vld [vmem:[%s166 + $0x718] sm:$0xff]
      %v413 = vld [vmem:[%s166 + $0x720] sm:$0xff]
      %v414 = vld [vmem:[%s166 + $0x728] sm:$0xff]
      %v415 = vld [vmem:[%s166 + $0x730] sm:$0xff]
      %v416 = vld [vmem:[%s166 + $0x738] sm:$0xff]
      %v417 = vld [vmem:[%s166 + $0x740] sm:$0xff]
      %v418 = vld [vmem:[%s166 + $0x748] sm:$0xff]
      %v419 = vld [vmem:[%s166 + $0x750] sm:$0xff]
      %v420 = vld [vmem:[%s166 + $0x758] sm:$0xff]
      %v421 = vld [vmem:[%s166 + $0x760] sm:$0xff]
      %v422 = vld [vmem:[%s166 + $0x768] sm:$0xff]
      %v423 = vld [vmem:[%s166 + $0x770] sm:$0xff]
      %v424 = vld [vmem:[%s166 + $0x778] sm:$0xff]
      %v425 = vld [vmem:[%s166 + $0x780] sm:$0xff]
      %v426 = vld [vmem:[%s166 + $0x788] sm:$0xff]
      %v427 = vld [vmem:[%s166 + $0x790] sm:$0xff]
      %v428 = vld [vmem:[%s166 + $0x798] sm:$0xff]
      %v429 = vld [vmem:[%s166 + $0x7a0] sm:$0xff]
      %v430 = vld [vmem:[%s166 + $0x7a8] sm:$0xff]
      %v431 = vld [vmem:[%s166 + $0x7b0] sm:$0xff]
      %v432 = vld [vmem:[%s166 + $0x7b8] sm:$0xff]
      %v433 = vld [vmem:[%s166 + $0x7c0] sm:$0xff]
      %v434 = vld [vmem:[%s166 + $0x7c8] sm:$0xff]
      %v435 = vld [vmem:[%s166 + $0x7d0] sm:$0xff]
      %v436 = vld [vmem:[%s166 + $0x7d8] sm:$0xff]
      %v437 = vld [vmem:[%s166 + $0x7e0] sm:$0xff]
      %v438 = vld [vmem:[%s166 + $0x7e8] sm:$0xff]
      %v439 = vld [vmem:[%s166 + $0x7f0] sm:$0xff]
      %v440 = vld [vmem:[%s166 + $0x7f8] sm:$0xff]
      %vm441 = vcmask 261120
      %v443 = vsel %vm441, %v185, 0
      %v446 = vsel %vm441, %v186, 0
      %v449 = vsel %vm441, %v187, 0
      %v452 = vsel %vm441, %v188, 0
      %v455 = vsel %vm441, %v189, 0
      %v458 = vsel %vm441, %v190, 0
      %v461 = vsel %vm441, %v191, 0
      %v464 = vsel %vm441, %v192, 0
      %v467 = vsel %vm441, %v193, 0
      %v470 = vsel %vm441, %v194, 0
      %v473 = vsel %vm441, %v195, 0
      %v476 = vsel %vm441, %v196, 0
      %v479 = vsel %vm441, %v197, 0
      %v482 = vsel %vm441, %v198, 0
      %v485 = vsel %vm441, %v199, 0
      %v488 = vsel %vm441, %v200, 0
      %v491 = vsel %vm441, %v201, 0
      %v494 = vsel %vm441, %v202, 0
      %v497 = vsel %vm441, %v203, 0
      %v500 = vsel %vm441, %v204, 0
      %v503 = vsel %vm441, %v205, 0
      %v506 = vsel %vm441, %v206, 0
      %v509 = vsel %vm441, %v207, 0
      %v512 = vsel %vm441, %v208, 0
      %v515 = vsel %vm441, %v209, 0
      %v518 = vsel %vm441, %v210, 0
      %v521 = vsel %vm441, %v211, 0
      %v524 = vsel %vm441, %v212, 0
      %v527 = vsel %vm441, %v213, 0
      %v530 = vsel %vm441, %v214, 0
      %v533 = vsel %vm441, %v215, 0
      %v536 = vsel %vm441, %v216, 0
      %v539 = vsel %vm441, %v217, 0
      %v542 = vsel %vm441, %v218, 0
      %v545 = vsel %vm441, %v219, 0
      %v548 = vsel %vm441, %v220, 0
      %v551 = vsel %vm441, %v221, 0
      %v554 = vsel %vm441, %v222, 0
      %v557 = vsel %vm441, %v223, 0
      %v560 = vsel %vm441, %v224, 0
      %v563 = vsel %vm441, %v225, 0
      %v566 = vsel %vm441, %v226, 0
      %v569 = vsel %vm441, %v227, 0
      %v572 = vsel %vm441, %v228, 0
      %v575 = vsel %vm441, %v229, 0
      %v578 = vsel %vm441, %v230, 0
      %v581 = vsel %vm441, %v231, 0
      %v584 = vsel %vm441, %v232, 0
      %v587 = vsel %vm441, %v233, 0
      %v590 = vsel %vm441, %v234, 0
      %v593 = vsel %vm441, %v235, 0
      %v596 = vsel %vm441, %v236, 0
      %v599 = vsel %vm441, %v237, 0
      %v602 = vsel %vm441, %v238, 0
      %v605 = vsel %vm441, %v239, 0
      %v608 = vsel %vm441, %v240, 0
      %v611 = vsel %vm441, %v241, 0
      %v614 = vsel %vm441, %v242, 0
      %v617 = vsel %vm441, %v243, 0
      %v620 = vsel %vm441, %v244, 0
      %v623 = vsel %vm441, %v245, 0
      %v626 = vsel %vm441, %v246, 0
      %v629 = vsel %vm441, %v247, 0
      %v632 = vsel %vm441, %v248, 0
      %v635 = vsel %vm441, %v249, 0
      %v638 = vsel %vm441, %v250, 0
      %v641 = vsel %vm441, %v251, 0
      %v644 = vsel %vm441, %v252, 0
      %v647 = vsel %vm441, %v253, 0
      %v650 = vsel %vm441, %v254, 0
      %v653 = vsel %vm441, %v255, 0
      %v656 = vsel %vm441, %v256, 0
      %v659 = vsel %vm441, %v257, 0
      %v662 = vsel %vm441, %v258, 0
      %v665 = vsel %vm441, %v259, 0
      %v668 = vsel %vm441, %v260, 0
      %v671 = vsel %vm441, %v261, 0
      %v674 = vsel %vm441, %v262, 0
      %v677 = vsel %vm441, %v263, 0
      %v680 = vsel %vm441, %v264, 0
      %v683 = vsel %vm441, %v265, 0
      %v686 = vsel %vm441, %v266, 0
      %v689 = vsel %vm441, %v267, 0
      %v692 = vsel %vm441, %v268, 0
      %v695 = vsel %vm441, %v269, 0
      %v698 = vsel %vm441, %v270, 0
      %v701 = vsel %vm441, %v271, 0
      %v704 = vsel %vm441, %v272, 0
      %v707 = vsel %vm441, %v273, 0
      %v710 = vsel %vm441, %v274, 0
      %v713 = vsel %vm441, %v275, 0
      %v716 = vsel %vm441, %v276, 0
      %v719 = vsel %vm441, %v277, 0
      %v722 = vsel %vm441, %v278, 0
      %v725 = vsel %vm441, %v279, 0
      %v728 = vsel %vm441, %v280, 0
      %v731 = vsel %vm441, %v281, 0
      %v734 = vsel %vm441, %v282, 0
      %v737 = vsel %vm441, %v283, 0
      %v740 = vsel %vm441, %v284, 0
      %v743 = vsel %vm441, %v285, 0
      %v746 = vsel %vm441, %v286, 0
      %v749 = vsel %vm441, %v287, 0
      %v752 = vsel %vm441, %v288, 0
      %v755 = vsel %vm441, %v289, 0
      %v758 = vsel %vm441, %v290, 0
      %v761 = vsel %vm441, %v291, 0
      %v764 = vsel %vm441, %v292, 0
      %v767 = vsel %vm441, %v293, 0
      %v770 = vsel %vm441, %v294, 0
      %v773 = vsel %vm441, %v295, 0
      %v776 = vsel %vm441, %v296, 0
      %v779 = vsel %vm441, %v297, 0
      %v782 = vsel %vm441, %v298, 0
      %v785 = vsel %vm441, %v299, 0
      %v788 = vsel %vm441, %v300, 0
      %v791 = vsel %vm441, %v301, 0
      %v794 = vsel %vm441, %v302, 0
      %v797 = vsel %vm441, %v303, 0
      %v800 = vsel %vm441, %v304, 0
      %v803 = vsel %vm441, %v305, 0
      %v806 = vsel %vm441, %v306, 0
      %v809 = vsel %vm441, %v307, 0
      %v812 = vsel %vm441, %v308, 0
      %v815 = vsel %vm441, %v309, 0
      %v818 = vsel %vm441, %v310, 0
      %v821 = vsel %vm441, %v311, 0
      %v824 = vsel %vm441, %v312, 0
      %v827 = vsel %vm441, %v313, 0
      %v830 = vsel %vm441, %v314, 0
      %v833 = vsel %vm441, %v315, 0
      %v836 = vsel %vm441, %v316, 0
      %v839 = vsel %vm441, %v317, 0
      %v842 = vsel %vm441, %v318, 0
      %v845 = vsel %vm441, %v319, 0
      %v848 = vsel %vm441, %v320, 0
      %v851 = vsel %vm441, %v321, 0
      %v854 = vsel %vm441, %v322, 0
      %v857 = vsel %vm441, %v323, 0
      %v860 = vsel %vm441, %v324, 0
      %v863 = vsel %vm441, %v325, 0
      %v866 = vsel %vm441, %v326, 0
      %v869 = vsel %vm441, %v327, 0
      %v872 = vsel %vm441, %v328, 0
      %v875 = vsel %vm441, %v329, 0
      %v878 = vsel %vm441, %v330, 0
      %v881 = vsel %vm441, %v331, 0
      %v884 = vsel %vm441, %v332, 0
      %v887 = vsel %vm441, %v333, 0
      %v890 = vsel %vm441, %v334, 0
      %v893 = vsel %vm441, %v335, 0
      %v896 = vsel %vm441, %v336, 0
      %v899 = vsel %vm441, %v337, 0
      %v902 = vsel %vm441, %v338, 0
      %v905 = vsel %vm441, %v339, 0
      %v908 = vsel %vm441, %v340, 0
      %v911 = vsel %vm441, %v341, 0
      %v914 = vsel %vm441, %v342, 0
      %v917 = vsel %vm441, %v343, 0
      %v920 = vsel %vm441, %v344, 0
      %v923 = vsel %vm441, %v345, 0
      %v926 = vsel %vm441, %v346, 0
      %v929 = vsel %vm441, %v347, 0
      %v932 = vsel %vm441, %v348, 0
      %v935 = vsel %vm441, %v349, 0
      %v938 = vsel %vm441, %v350, 0
      %v941 = vsel %vm441, %v351, 0
      %v944 = vsel %vm441, %v352, 0
      %v947 = vsel %vm441, %v353, 0
      %v950 = vsel %vm441, %v354, 0
      %v953 = vsel %vm441, %v355, 0
      %v956 = vsel %vm441, %v356, 0
      %v959 = vsel %vm441, %v357, 0
      %v962 = vsel %vm441, %v358, 0
      %v965 = vsel %vm441, %v359, 0
      %v968 = vsel %vm441, %v360, 0
      %v971 = vsel %vm441, %v361, 0
      %v974 = vsel %vm441, %v362, 0
      %v977 = vsel %vm441, %v363, 0
      %v980 = vsel %vm441, %v364, 0
      %v983 = vsel %vm441, %v365, 0
      %v986 = vsel %vm441, %v366, 0
      %v989 = vsel %vm441, %v367, 0
      %v992 = vsel %vm441, %v368, 0
      %v995 = vsel %vm441, %v369, 0
      %v998 = vsel %vm441, %v370, 0
      %v1001 = vsel %vm441, %v371, 0
      %v1004 = vsel %vm441, %v372, 0
      %v1007 = vsel %vm441, %v373, 0
      %v1010 = vsel %vm441, %v374, 0
      %v1013 = vsel %vm441, %v375, 0
      %v1016 = vsel %vm441, %v376, 0
      %v1019 = vsel %vm441, %v377, 0
      %v1022 = vsel %vm441, %v378, 0
      %v1025 = vsel %vm441, %v379, 0
      %v1028 = vsel %vm441, %v380, 0
      %v1031 = vsel %vm441, %v381, 0
      %v1034 = vsel %vm441, %v382, 0
      %v1037 = vsel %vm441, %v383, 0
      %v1040 = vsel %vm441, %v384, 0
      %v1043 = vsel %vm441, %v385, 0
      %v1046 = vsel %vm441, %v386, 0
      %v1049 = vsel %vm441, %v387, 0
      %v1052 = vsel %vm441, %v388, 0
      %v1055 = vsel %vm441, %v389, 0
      %v1058 = vsel %vm441, %v390, 0
      %v1061 = vsel %vm441, %v391, 0
      %v1064 = vsel %vm441, %v392, 0
      %v1067 = vsel %vm441, %v393, 0
      %v1070 = vsel %vm441, %v394, 0
      %v1073 = vsel %vm441, %v395, 0
      %v1076 = vsel %vm441, %v396, 0
      %v1079 = vsel %vm441, %v397, 0
      %v1082 = vsel %vm441, %v398, 0
      %v1085 = vsel %vm441, %v399, 0
      %v1088 = vsel %vm441, %v400, 0
      %v1091 = vsel %vm441, %v401, 0
      %v1094 = vsel %vm441, %v402, 0
      %v1097 = vsel %vm441, %v403, 0
      %v1100 = vsel %vm441, %v404, 0
      %v1103 = vsel %vm441, %v405, 0
      %v1106 = vsel %vm441, %v406, 0
      %v1109 = vsel %vm441, %v407, 0
      %v1112 = vsel %vm441, %v408, 0
      %v1115 = vsel %vm441, %v409, 0
      %v1118 = vsel %vm441, %v410, 0
      %v1121 = vsel %vm441, %v411, 0
      %v1124 = vsel %vm441, %v412, 0
      %v1127 = vsel %vm441, %v413, 0
      %v1130 = vsel %vm441, %v414, 0
      %v1133 = vsel %vm441, %v415, 0
      %v1136 = vsel %vm441, %v416, 0
      %v1139 = vsel %vm441, %v417, 0
      %v1142 = vsel %vm441, %v418, 0
      %v1145 = vsel %vm441, %v419, 0
      %v1148 = vsel %vm441, %v420, 0
      %v1151 = vsel %vm441, %v421, 0
      %v1154 = vsel %vm441, %v422, 0
      %v1157 = vsel %vm441, %v423, 0
      %v1160 = vsel %vm441, %v424, 0
      %v1163 = vsel %vm441, %v425, 0
      %v1166 = vsel %vm441, %v426, 0
      %v1169 = vsel %vm441, %v427, 0
      %v1172 = vsel %vm441, %v428, 0
      %v1175 = vsel %vm441, %v429, 0
      %v1178 = vsel %vm441, %v430, 0
      %v1181 = vsel %vm441, %v431, 0
      %v1184 = vsel %vm441, %v432, 0
      %v1187 = vsel %vm441, %v433, 0
      %v1190 = vsel %vm441, %v434, 0
      %v1193 = vsel %vm441, %v435, 0
      %v1196 = vsel %vm441, %v436, 0
      %v1199 = vsel %vm441, %v437, 0
      %v1202 = vsel %vm441, %v438, 0
      %v1205 = vsel %vm441, %v439, 0
      %v1208 = vsel %vm441, %v440, 0
      %1210 = vmatprep.subr.mxu0 0.0
      %1211 = vmatpush1.msra.mxu0 %v181
      %1212 = vmatprep.subr.mxu0 0.0
      %1213 = vmatpush1.msra.mxu0 %v182
      %1214 = vmatprep.subr.mxu0 0.0
      %1215 = vmatpush1.msra.mxu0 %v183
      %1216 = vmatprep.subr.mxu0 0.0
      %1217 = vmatpush1.msra.mxu0 %v184
      %1218 = vmatprep.subr.mxu0 0.0
      %1219 = vmatpush1.msra.mxu0 0.0
      %1220 = vmatprep.subr.mxu0 0.0
      %1221 = vmatpush1.msra.mxu0 0.0
      %1222 = vmatprep.subr.mxu0 0.0
      %1223 = vmatpush1.msra.mxu0 0.0
      %1224 = vmatprep.subr.mxu0 0.0
      %1225 = vmatpush1.msra.mxu0 0.0
      %1226 = vmatprep.subr.mxu0 0.0
      %1227 = vmatpush1.msra.mxu0 0.0
      %1228 = vmatprep.subr.mxu0 0.0
      %1229 = vmatpush1.msra.mxu0 0.0
      %1230 = vmatprep.subr.mxu0 0.0
      %1231 = vmatpush1.msra.mxu0 0.0
      %1232 = vmatprep.subr.mxu0 0.0
      %1233 = vmatpush1.msra.mxu0 0.0
      %1234 = vmatprep.subr.mxu0 0.0
      %1235 = vmatpush1.msra.mxu0 0.0
      %1236 = vmatprep.subr.mxu0 0.0
      %1237 = vmatpush1.msra.mxu0 0.0
      %1238 = vmatprep.subr.mxu0 0.0
      %1239 = vmatpush1.msra.mxu0 0.0
      %1240 = vmatprep.subr.mxu0 0.0
      %1241 = vmatpush1.msra.mxu0 0.0
      %1242 = vmatprep.subr.mxu0 0.0
      %1243 = vmatpush1.msra.mxu0 0.0
      %1244 = vmatprep.subr.mxu0 0.0
      %1245 = vmatpush1.msra.mxu0 0.0
      %1246 = vmatprep.subr.mxu0 0.0
      %1247 = vmatpush1.msra.mxu0 0.0
      %1248 = vmatprep.subr.mxu0 0.0
      %1249 = vmatpush1.msra.mxu0 0.0
      %1250 = vmatprep.subr.mxu0 0.0
      %1251 = vmatpush1.msra.mxu0 0.0
      %1252 = vmatprep.subr.mxu0 0.0
      %1253 = vmatpush1.msra.mxu0 0.0
      %1254 = vmatprep.subr.mxu0 0.0
      %1255 = vmatpush1.msra.mxu0 0.0
      %1256 = vmatprep.subr.mxu0 0.0
      %1257 = vmatpush1.msra.mxu0 0.0
      %1258 = vmatprep.subr.mxu0 0.0
      %1259 = vmatpush1.msra.mxu0 0.0
      %1260 = vmatprep.subr.mxu0 0.0
      %1261 = vmatpush1.msra.mxu0 0.0
      %1262 = vmatprep.subr.mxu0 0.0
      %1263 = vmatpush1.msra.mxu0 0.0
      %1264 = vmatprep.subr.mxu0 0.0
      %1265 = vmatpush1.msra.mxu0 0.0
      %1266 = vmatprep.subr.mxu0 0.0
      %1267 = vmatpush1.msra.mxu0 0.0
      %1268 = vmatprep.subr.mxu0 0.0
      %1269 = vmatpush1.msra.mxu0 0.0
      %1270 = vmatprep.subr.mxu0 0.0
      %1271 = vmatpush1.msra.mxu0 0.0
      %1272 = vmatprep.subr.mxu0 0.0
      %1273 = vmatpush1.msra.mxu0 0.0
      %1274 = vmatprep.mubr.f32.mxu0 0.0
      %1275 = vmatmul.mubr.f32.gmra.mrb[0].mxu0 %v443
      %v1276 = vpop.f32.mrb[0].mxu0
      %v1277 = vadd.f32 0.0, %v1276
      %v1278 = vpop.f32.mrb[0].mxu0
      %1279 = vmatprep.mubr.f32.mxu0 0.0
      %1280 = vmatmul.mubr.f32.gmra.mrb[0].mxu0 %v446
      %v1281 = vpop.f32.mrb[0].mxu0
      %v1282 = vadd.f32 0.0, %v1281
      %v1283 = vpop.f32.mrb[0].mxu0
      %1284 = vmatprep.mubr.f32.mxu0 0.0
      %1285 = vmatmul.mubr.f32.gmra.mrb[0].mxu0 %v449
      %v1286 = vpop.f32.mrb[0].mxu0
      %v1287 = vadd.f32 0.0, %v1286
      %v1288 = vpop.f32.mrb[0].mxu0
      %1289 = vmatprep.mubr.f32.mxu0 0.0
      %1290 = vmatmul.mubr.f32.gmra.mrb[0].mxu0 %v452
      %v1291 = vpop.f32.mrb[0].mxu0
      %v1292 = vadd.f32 0.0, %v1291
      %v1293 = vpop.f32.mrb[0].mxu0
      %1294 = vmatprep.mubr.f32.mxu0 0.0
      %1295 = vmatmul.mubr.f32.gmra.mrb[0].mxu0 %v455
      %v1296 = vpop.f32.mrb[0].mxu0
      %v1297 = vadd.f32 0.0, %v1296
      %v1298 = vpop.f32.mrb[0].mxu0
      %1299 = vmatprep.mubr.f32.mxu0 0.0
      %1300 = vmatmul.mubr.f32.gmra.mrb[0].mxu0 %v458
      %v1301 = vpop.f32.mrb[0].mxu0
      %v1302 = vadd.f32 0.0, %v1301
      %v1303 = vpop.f32.mrb[0].mxu0
      %1304 = vmatprep.mubr.f32.mxu0 0.0
      %1305 = vmatmul.mubr.f32.gmra.mrb[0].mxu0 %v461
      %v1306 = vpop.f32.mrb[0].mxu0
      %v1307 = vadd.f32 0.0, %v1306
      %v1308 = vpop.f32.mrb[0].mxu0
      %1309 = vmatprep.mubr.f32.mxu0 0.0
      %1310 = vmatmul.mubr.f32.gmra.mrb[0].mxu0 %v464
      %v1311 = vpop.f32.mrb[0].mxu0
      %v1312 = vadd.f32 0.0, %v1311
      %v1313 = vpop.f32.mrb[0].mxu0
      %1314 = vmatprep.mubr.f32.mxu0 0.0
      %1315 = vmatmul.mubr.f32.gmra.mrb[0].mxu0 %v467
      %v1316 = vpop.f32.mrb[0].mxu0
      %v1317 = vadd.f32 0.0, %v1316
      %v1318 = vpop.f32.mrb[0].mxu0
      %1319 = vmatprep.mubr.f32.mxu0 0.0
      %1320 = vmatmul.mubr.f32.gmra.mrb[0].mxu0 %v470
      %v1321 = vpop.f32.mrb[0].mxu0
      %v1322 = vadd.f32 0.0, %v1321
      %v1323 = vpop.f32.mrb[0].mxu0
      %1324 = vmatprep.mubr.f32.mxu0 0.0
      %1325 = vmatmul.mubr.f32.gmra.mrb[0].mxu0 %v473
      %v1326 = vpop.f32.mrb[0].mxu0
      %v1327 = vadd.f32 0.0, %v1326
      %v1328 = vpop.f32.mrb[0].mxu0
      %1329 = vmatprep.mubr.f32.mxu0 0.0
      %1330 = vmatmul.mubr.f32.gmra.mrb[0].mxu0 %v476
      %v1331 = vpop.f32.mrb[0].mxu0
      %v1332 = vadd.f32 0.0, %v1331
      %v1333 = vpop.f32.mrb[0].mxu0
      %1334 = vmatprep.mubr.f32.mxu0 0.0
      %1335 = vmatmul.mubr.f32.gmra.mrb[0].mxu0 %v479
      %v1336 = vpop.f32.mrb[0].mxu0
      %v1337 = vadd.f32 0.0, %v1336
      %v1338 = vpop.f32.mrb[0].mxu0
      %1339 = vmatprep.mubr.f32.mxu0 0.0
      %1340 = vmatmul.mubr.f32.gmra.mrb[0].mxu0 %v482
      %v1341 = vpop.f32.mrb[0].mxu0
      %v1342 = vadd.f32 0.0, %v1341
      %v1343 = vpop.f32.mrb[0].mxu0
      %1344 = vmatprep.mubr.f32.mxu0 0.0
      %1345 = vmatmul.mubr.f32.gmra.mrb[0].mxu0 %v485
      %v1346 = vpop.f32.mrb[0].mxu0
      %v1347 = vadd.f32 0.0, %v1346
      %v1348 = vpop.f32.mrb[0].mxu0
      %1349 = vmatprep.mubr.f32.mxu0 0.0
      %1350 = vmatmul.mubr.f32.gmra.mrb[0].mxu0 %v488
      %v1351 = vpop.f32.mrb[0].mxu0
      %v1352 = vadd.f32 0.0, %v1351
      %v1353 = vpop.f32.mrb[0].mxu0
      %1354 = vmatprep.mubr.f32.mxu0 0.0
      %1355 = vmatmul.mubr.f32.gmra.mrb[0].mxu0 %v491
      %v1356 = vpop.f32.mrb[0].mxu0
      %v1357 = vadd.f32 0.0, %v1356
      %v1358 = vpop.f32.mrb[0].mxu0
      %1359 = vmatprep.mubr.f32.mxu0 0.0
      %1360 = vmatmul.mubr.f32.gmra.mrb[0].mxu0 %v494
      %v1361 = vpop.f32.mrb[0].mxu0
      %v1362 = vadd.f32 0.0, %v1361
      %v1363 = vpop.f32.mrb[0].mxu0
      %1364 = vmatprep.mubr.f32.mxu0 0.0
      %1365 = vmatmul.mubr.f32.gmra.mrb[0].mxu0 %v497
      %v1366 = vpop.f32.mrb[0].mxu0
      %v1367 = vadd.f32 0.0, %v1366
      %v1368 = vpop.f32.mrb[0].mxu0
      %1369 = vmatprep.mubr.f32.mxu0 0.0
      %1370 = vmatmul.mubr.f32.gmra.mrb[0].mxu0 %v500
      %v1371 = vpop.f32.mrb[0].mxu0
      %v1372 = vadd.f32 0.0, %v1371
      %v1373 = vpop.f32.mrb[0].mxu0
      %1374 = vmatprep.mubr.f32.mxu0 0.0
      %1375 = vmatmul.mubr.f32.gmra.mrb[0].mxu0 %v503
      %v1376 = vpop.f32.mrb[0].mxu0
      %v1377 = vadd.f32 0.0, %v1376
      %v1378 = vpop.f32.mrb[0].mxu0
      %1379 = vmatprep.mubr.f32.mxu0 0.0
      %1380 = vmatmul.mubr.f32.gmra.mrb[0].mxu0 %v506
      %v1381 = vpop.f32.mrb[0].mxu0
      %v1382 = vadd.f32 0.0, %v1381
      %v1383 = vpop.f32.mrb[0].mxu0
      %1384 = vmatprep.mubr.f32.mxu0 0.0
      %1385 = vmatmul.mubr.f32.gmra.mrb[0].mxu0 %v509
      %v1386 = vpop.f32.mrb[0].mxu0
      %v1387 = vadd.f32 0.0, %v1386
      %v1388 = vpop.f32.mrb[0].mxu0
      %1389 = vmatprep.mubr.f32.mxu0 0.0
      %1390 = vmatmul.mubr.f32.gmra.mrb[0].mxu0 %v512
      %v1391 = vpop.f32.mrb[0].mxu0
      %v1392 = vadd.f32 0.0, %v1391
      %v1393 = vpop.f32.mrb[0].mxu0
      %1394 = vmatprep.mubr.f32.mxu0 0.0
      %1395 = vmatmul.mubr.f32.gmra.mrb[0].mxu0 %v515
      %v1396 = vpop.f32.mrb[0].mxu0
      %v1397 = vadd.f32 0.0, %v1396
      %v1398 = vpop.f32.mrb[0].mxu0
      %1399 = vmatprep.mubr.f32.mxu0 0.0
      %1400 = vmatmul.mubr.f32.gmra.mrb[0].mxu0 %v518
      %v1401 = vpop.f32.mrb[0].mxu0
      %v1402 = vadd.f32 0.0, %v1401
      %v1403 = vpop.f32.mrb[0].mxu0
      %1404 = vmatprep.mubr.f32.mxu0 0.0
      %1405 = vmatmul.mubr.f32.gmra.mrb[0].mxu0 %v521
      %v1406 = vpop.f32.mrb[0].mxu0
      %v1407 = vadd.f32 0.0, %v1406
      %v1408 = vpop.f32.mrb[0].mxu0
      %1409 = vmatprep.mubr.f32.mxu0 0.0
      %1410 = vmatmul.mubr.f32.gmra.mrb[0].mxu0 %v524
      %v1411 = vpop.f32.mrb[0].mxu0
      %v1412 = vadd.f32 0.0, %v1411
      %v1413 = vpop.f32.mrb[0].mxu0
      %1414 = vmatprep.mubr.f32.mxu0 0.0
      %1415 = vmatmul.mubr.f32.gmra.mrb[0].mxu0 %v527
      %v1416 = vpop.f32.mrb[0].mxu0
      %v1417 = vadd.f32 0.0, %v1416
      %v1418 = vpop.f32.mrb[0].mxu0
      %1419 = vmatprep.mubr.f32.mxu0 0.0
      %1420 = vmatmul.mubr.f32.gmra.mrb[0].mxu0 %v530
      %v1421 = vpop.f32.mrb[0].mxu0
      %v1422 = vadd.f32 0.0, %v1421
      %v1423 = vpop.f32.mrb[0].mxu0
      %1424 = vmatprep.mubr.f32.mxu0 0.0
      %1425 = vmatmul.mubr.f32.gmra.mrb[0].mxu0 %v533
      %v1426 = vpop.f32.mrb[0].mxu0
      %v1427 = vadd.f32 0.0, %v1426
      %v1428 = vpop.f32.mrb[0].mxu0
      %1429 = vmatprep.mubr.f32.mxu0 0.0
      %1430 = vmatmul.mubr.f32.gmra.mrb[0].mxu0 %v536
      %v1431 = vpop.f32.mrb[0].mxu0
      %v1432 = vadd.f32 0.0, %v1431
      %v1433 = vpop.f32.mrb[0].mxu0
      %1434 = vmatprep.mubr.f32.mxu0 0.0
      %1435 = vmatmul.mubr.f32.gmra.mrb[0].mxu0 %v539
      %v1436 = vpop.f32.mrb[0].mxu0
      %v1437 = vadd.f32 0.0, %v1436
      %v1438 = vpop.f32.mrb[0].mxu0
      %1439 = vmatprep.mubr.f32.mxu0 0.0
      %1440 = vmatmul.mubr.f32.gmra.mrb[0].mxu0 %v542
      %v1441 = vpop.f32.mrb[0].mxu0
      %v1442 = vadd.f32 0.0, %v1441
      %v1443 = vpop.f32.mrb[0].mxu0
      %1444 = vmatprep.mubr.f32.mxu0 0.0
      %1445 = vmatmul.mubr.f32.gmra.mrb[0].mxu0 %v545
      %v1446 = vpop.f32.mrb[0].mxu0
      %v1447 = vadd.f32 0.0, %v1446
      %v1448 = vpop.f32.mrb[0].mxu0
      %1449 = vmatprep.mubr.f32.mxu0 0.0
      %1450 = vmatmul.mubr.f32.gmra.mrb[0].mxu0 %v548
      %v1451 = vpop.f32.mrb[0].mxu0
      %v1452 = vadd.f32 0.0, %v1451
      %v1453 = vpop.f32.mrb[0].mxu0
      %1454 = vmatprep.mubr.f32.mxu0 0.0
      %1455 = vmatmul.mubr.f32.gmra.mrb[0].mxu0 %v551
      %v1456 = vpop.f32.mrb[0].mxu0
      %v1457 = vadd.f32 0.0, %v1456
      %v1458 = vpop.f32.mrb[0].mxu0
      %1459 = vmatprep.mubr.f32.mxu0 0.0
      %1460 = vmatmul.mubr.f32.gmra.mrb[0].mxu0 %v554
      %v1461 = vpop.f32.mrb[0].mxu0
      %v1462 = vadd.f32 0.0, %v1461
      %v1463 = vpop.f32.mrb[0].mxu0
      %1464 = vmatprep.mubr.f32.mxu0 0.0
      %1465 = vmatmul.mubr.f32.gmra.mrb[0].mxu0 %v557
      %v1466 = vpop.f32.mrb[0].mxu0
      %v1467 = vadd.f32 0.0, %v1466
      %v1468 = vpop.f32.mrb[0].mxu0
      %1469 = vmatprep.mubr.f32.mxu0 0.0
      %1470 = vmatmul.mubr.f32.gmra.mrb[0].mxu0 %v560
      %v1471 = vpop.f32.mrb[0].mxu0
      %v1472 = vadd.f32 0.0, %v1471
      %v1473 = vpop.f32.mrb[0].mxu0
      %1474 = vmatprep.mubr.f32.mxu0 0.0
      %1475 = vmatmul.mubr.f32.gmra.mrb[0].mxu0 %v563
      %v1476 = vpop.f32.mrb[0].mxu0
      %v1477 = vadd.f32 0.0, %v1476
      %v1478 = vpop.f32.mrb[0].mxu0
      %1479 = vmatprep.mubr.f32.mxu0 0.0
      %1480 = vmatmul.mubr.f32.gmra.mrb[0].mxu0 %v566
      %v1481 = vpop.f32.mrb[0].mxu0
      %v1482 = vadd.f32 0.0, %v1481
      %v1483 = vpop.f32.mrb[0].mxu0
      %1484 = vmatprep.mubr.f32.mxu0 0.0
      %1485 = vmatmul.mubr.f32.gmra.mrb[0].mxu0 %v569
      %v1486 = vpop.f32.mrb[0].mxu0
      %v1487 = vadd.f32 0.0, %v1486
      %v1488 = vpop.f32.mrb[0].mxu0
      %1489 = vmatprep.mubr.f32.mxu0 0.0
      %1490 = vmatmul.mubr.f32.gmra.mrb[0].mxu0 %v572
      %v1491 = vpop.f32.mrb[0].mxu0
      %v1492 = vadd.f32 0.0, %v1491
      %v1493 = vpop.f32.mrb[0].mxu0
      %1494 = vmatprep.mubr.f32.mxu0 0.0
      %1495 = vmatmul.mubr.f32.gmra.mrb[0].mxu0 %v575
      %v1496 = vpop.f32.mrb[0].mxu0
      %v1497 = vadd.f32 0.0, %v1496
      %v1498 = vpop.f32.mrb[0].mxu0
      %1499 = vmatprep.mubr.f32.mxu0 0.0
      %1500 = vmatmul.mubr.f32.gmra.mrb[0].mxu0 %v578
      %v1501 = vpop.f32.mrb[0].mxu0
      %v1502 = vadd.f32 0.0, %v1501
      %v1503 = vpop.f32.mrb[0].mxu0
      %1504 = vmatprep.mubr.f32.mxu0 0.0
      %1505 = vmatmul.mubr.f32.gmra.mrb[0].mxu0 %v581
      %v1506 = vpop.f32.mrb[0].mxu0
      %v1507 = vadd.f32 0.0, %v1506
      %v1508 = vpop.f32.mrb[0].mxu0
      %1509 = vmatprep.mubr.f32.mxu0 0.0
      %1510 = vmatmul.mubr.f32.gmra.mrb[0].mxu0 %v584
      %v1511 = vpop.f32.mrb[0].mxu0
      %v1512 = vadd.f32 0.0, %v1511
      %v1513 = vpop.f32.mrb[0].mxu0
      %1514 = vmatprep.mubr.f32.mxu0 0.0
      %1515 = vmatmul.mubr.f32.gmra.mrb[0].mxu0 %v587
      %v1516 = vpop.f32.mrb[0].mxu0
      %v1517 = vadd.f32 0.0, %v1516
      %v1518 = vpop.f32.mrb[0].mxu0
      %1519 = vmatprep.mubr.f32.mxu0 0.0
      %1520 = vmatmul.mubr.f32.gmra.mrb[0].mxu0 %v590
      %v1521 = vpop.f32.mrb[0].mxu0
      %v1522 = vadd.f32 0.0, %v1521
      %v1523 = vpop.f32.mrb[0].mxu0
      %1524 = vmatprep.mubr.f32.mxu0 0.0
      %1525 = vmatmul.mubr.f32.gmra.mrb[0].mxu0 %v593
      %v1526 = vpop.f32.mrb[0].mxu0
      %v1527 = vadd.f32 0.0, %v1526
      %v1528 = vpop.f32.mrb[0].mxu0
      %1529 = vmatprep.mubr.f32.mxu0 0.0
      %1530 = vmatmul.mubr.f32.gmra.mrb[0].mxu0 %v596
      %v1531 = vpop.f32.mrb[0].mxu0
      %v1532 = vadd.f32 0.0, %v1531
      %v1533 = vpop.f32.mrb[0].mxu0
      %1534 = vmatprep.mubr.f32.mxu0 0.0
      %1535 = vmatmul.mubr.f32.gmra.mrb[0].mxu0 %v599
      %v1536 = vpop.f32.mrb[0].mxu0
      %v1537 = vadd.f32 0.0, %v1536
      %v1538 = vpop.f32.mrb[0].mxu0
      %1539 = vmatprep.mubr.f32.mxu0 0.0
      %1540 = vmatmul.mubr.f32.gmra.mrb[0].mxu0 %v602
      %v1541 = vpop.f32.mrb[0].mxu0
      %v1542 = vadd.f32 0.0, %v1541
      %v1543 = vpop.f32.mrb[0].mxu0
      %1544 = vmatprep.mubr.f32.mxu0 0.0
      %1545 = vmatmul.mubr.f32.gmra.mrb[0].mxu0 %v605
      %v1546 = vpop.f32.mrb[0].mxu0
      %v1547 = vadd.f32 0.0, %v1546
      %v1548 = vpop.f32.mrb[0].mxu0
      %1549 = vmatprep.mubr.f32.mxu0 0.0
      %1550 = vmatmul.mubr.f32.gmra.mrb[0].mxu0 %v608
      %v1551 = vpop.f32.mrb[0].mxu0
      %v1552 = vadd.f32 0.0, %v1551
      %v1553 = vpop.f32.mrb[0].mxu0
      %1554 = vmatprep.mubr.f32.mxu0 0.0
      %1555 = vmatmul.mubr.f32.gmra.mrb[0].mxu0 %v611
      %v1556 = vpop.f32.mrb[0].mxu0
      %v1557 = vadd.f32 0.0, %v1556
      %v1558 = vpop.f32.mrb[0].mxu0
      %1559 = vmatprep.mubr.f32.mxu0 0.0
      %1560 = vmatmul.mubr.f32.gmra.mrb[0].mxu0 %v614
      %v1561 = vpop.f32.mrb[0].mxu0
      %v1562 = vadd.f32 0.0, %v1561
      %v1563 = vpop.f32.mrb[0].mxu0
      %1564 = vmatprep.mubr.f32.mxu0 0.0
      %1565 = vmatmul.mubr.f32.gmra.mrb[0].mxu0 %v617
      %v1566 = vpop.f32.mrb[0].mxu0
      %v1567 = vadd.f32 0.0, %v1566
      %v1568 = vpop.f32.mrb[0].mxu0
      %1569 = vmatprep.mubr.f32.mxu0 0.0
      %1570 = vmatmul.mubr.f32.gmra.mrb[0].mxu0 %v620
      %v1571 = vpop.f32.mrb[0].mxu0
      %v1572 = vadd.f32 0.0, %v1571
      %v1573 = vpop.f32.mrb[0].mxu0
      %1574 = vmatprep.mubr.f32.mxu0 0.0
      %1575 = vmatmul.mubr.f32.gmra.mrb[0].mxu0 %v623
      %v1576 = vpop.f32.mrb[0].mxu0
      %v1577 = vadd.f32 0.0, %v1576
      %v1578 = vpop.f32.mrb[0].mxu0
      %1579 = vmatprep.mubr.f32.mxu0 0.0
      %1580 = vmatmul.mubr.f32.gmra.mrb[0].mxu0 %v626
      %v1581 = vpop.f32.mrb[0].mxu0
      %v1582 = vadd.f32 0.0, %v1581
      %v1583 = vpop.f32.mrb[0].mxu0
      %1584 = vmatprep.mubr.f32.mxu0 0.0
      %1585 = vmatmul.mubr.f32.gmra.mrb[0].mxu0 %v629
      %v1586 = vpop.f32.mrb[0].mxu0
      %v1587 = vadd.f32 0.0, %v1586
      %v1588 = vpop.f32.mrb[0].mxu0
      %1589 = vmatprep.mubr.f32.mxu0 0.0
      %1590 = vmatmul.mubr.f32.gmra.mrb[0].mxu0 %v632
      %v1591 = vpop.f32.mrb[0].mxu0
      %v1592 = vadd.f32 0.0, %v1591
      %v1593 = vpop.f32.mrb[0].mxu0
      %1594 = vmatprep.mubr.f32.mxu0 0.0
      %1595 = vmatmul.mubr.f32.gmra.mrb[0].mxu0 %v635
      %v1596 = vpop.f32.mrb[0].mxu0
      %v1597 = vadd.f32 0.0, %v1596
      %v1598 = vpop.f32.mrb[0].mxu0
      %1599 = vmatprep.mubr.f32.mxu0 0.0
      %1600 = vmatmul.mubr.f32.gmra.mrb[0].mxu0 %v638
      %v1601 = vpop.f32.mrb[0].mxu0
      %v1602 = vadd.f32 0.0, %v1601
      %v1603 = vpop.f32.mrb[0].mxu0
      %1604 = vmatprep.mubr.f32.mxu0 0.0
      %1605 = vmatmul.mubr.f32.gmra.mrb[0].mxu0 %v641
      %v1606 = vpop.f32.mrb[0].mxu0
      %v1607 = vadd.f32 0.0, %v1606
      %v1608 = vpop.f32.mrb[0].mxu0
      %1609 = vmatprep.mubr.f32.mxu0 0.0
      %1610 = vmatmul.mubr.f32.gmra.mrb[0].mxu0 %v644
      %v1611 = vpop.f32.mrb[0].mxu0
      %v1612 = vadd.f32 0.0, %v1611
      %v1613 = vpop.f32.mrb[0].mxu0
      %1614 = vmatprep.mubr.f32.mxu0 0.0
      %1615 = vmatmul.mubr.f32.gmra.mrb[0].mxu0 %v647
      %v1616 = vpop.f32.mrb[0].mxu0
      %v1617 = vadd.f32 0.0, %v1616
      %v1618 = vpop.f32.mrb[0].mxu0
      %1619 = vmatprep.mubr.f32.mxu0 0.0
      %1620 = vmatmul.mubr.f32.gmra.mrb[0].mxu0 %v650
      %v1621 = vpop.f32.mrb[0].mxu0
      %v1622 = vadd.f32 0.0, %v1621
      %v1623 = vpop.f32.mrb[0].mxu0
      %1624 = vmatprep.mubr.f32.mxu0 0.0
      %1625 = vmatmul.mubr.f32.gmra.mrb[0].mxu0 %v653
      %v1626 = vpop.f32.mrb[0].mxu0
      %v1627 = vadd.f32 0.0, %v1626
      %v1628 = vpop.f32.mrb[0].mxu0
      %1629 = vmatprep.mubr.f32.mxu0 0.0
      %1630 = vmatmul.mubr.f32.gmra.mrb[0].mxu0 %v656
      %v1631 = vpop.f32.mrb[0].mxu0
      %v1632 = vadd.f32 0.0, %v1631
      %v1633 = vpop.f32.mrb[0].mxu0
      %1634 = vmatprep.mubr.f32.mxu0 0.0
      %1635 = vmatmul.mubr.f32.gmra.mrb[0].mxu0 %v659
      %v1636 = vpop.f32.mrb[0].mxu0
      %v1637 = vadd.f32 0.0, %v1636
      %v1638 = vpop.f32.mrb[0].mxu0
      %1639 = vmatprep.mubr.f32.mxu0 0.0
      %1640 = vmatmul.mubr.f32.gmra.mrb[0].mxu0 %v662
      %v1641 = vpop.f32.mrb[0].mxu0
      %v1642 = vadd.f32 0.0, %v1641
      %v1643 = vpop.f32.mrb[0].mxu0
      %1644 = vmatprep.mubr.f32.mxu0 0.0
      %1645 = vmatmul.mubr.f32.gmra.mrb[0].mxu0 %v665
      %v1646 = vpop.f32.mrb[0].mxu0
      %v1647 = vadd.f32 0.0, %v1646
      %v1648 = vpop.f32.mrb[0].mxu0
      %1649 = vmatprep.mubr.f32.mxu0 0.0
      %1650 = vmatmul.mubr.f32.gmra.mrb[0].mxu0 %v668
      %v1651 = vpop.f32.mrb[0].mxu0
      %v1652 = vadd.f32 0.0, %v1651
      %v1653 = vpop.f32.mrb[0].mxu0
      %1654 = vmatprep.mubr.f32.mxu0 0.0
      %1655 = vmatmul.mubr.f32.gmra.mrb[0].mxu0 %v671
      %v1656 = vpop.f32.mrb[0].mxu0
      %v1657 = vadd.f32 0.0, %v1656
      %v1658 = vpop.f32.mrb[0].mxu0
      %1659 = vmatprep.mubr.f32.mxu0 0.0
      %1660 = vmatmul.mubr.f32.gmra.mrb[0].mxu0 %v674
      %v1661 = vpop.f32.mrb[0].mxu0
      %v1662 = vadd.f32 0.0, %v1661
      %v1663 = vpop.f32.mrb[0].mxu0
      %1664 = vmatprep.mubr.f32.mxu0 0.0
      %1665 = vmatmul.mubr.f32.gmra.mrb[0].mxu0 %v677
      %v1666 = vpop.f32.mrb[0].mxu0
      %v1667 = vadd.f32 0.0, %v1666
      %v1668 = vpop.f32.mrb[0].mxu0
      %1669 = vmatprep.mubr.f32.mxu0 0.0
      %1670 = vmatmul.mubr.f32.gmra.mrb[0].mxu0 %v680
      %v1671 = vpop.f32.mrb[0].mxu0
      %v1672 = vadd.f32 0.0, %v1671
      %v1673 = vpop.f32.mrb[0].mxu0
      %1674 = vmatprep.mubr.f32.mxu0 0.0
      %1675 = vmatmul.mubr.f32.gmra.mrb[0].mxu0 %v683
      %v1676 = vpop.f32.mrb[0].mxu0
      %v1677 = vadd.f32 0.0, %v1676
      %v1678 = vpop.f32.mrb[0].mxu0
      %1679 = vmatprep.mubr.f32.mxu0 0.0
      %1680 = vmatmul.mubr.f32.gmra.mrb[0].mxu0 %v686
      %v1681 = vpop.f32.mrb[0].mxu0
      %v1682 = vadd.f32 0.0, %v1681
      %v1683 = vpop.f32.mrb[0].mxu0
      %1684 = vmatprep.mubr.f32.mxu0 0.0
      %1685 = vmatmul.mubr.f32.gmra.mrb[0].mxu0 %v689
      %v1686 = vpop.f32.mrb[0].mxu0
      %v1687 = vadd.f32 0.0, %v1686
      %v1688 = vpop.f32.mrb[0].mxu0
      %1689 = vmatprep.mubr.f32.mxu0 0.0
      %1690 = vmatmul.mubr.f32.gmra.mrb[0].mxu0 %v692
      %v1691 = vpop.f32.mrb[0].mxu0
      %v1692 = vadd.f32 0.0, %v1691
      %v1693 = vpop.f32.mrb[0].mxu0
      %1694 = vmatprep.mubr.f32.mxu0 0.0
      %1695 = vmatmul.mubr.f32.gmra.mrb[0].mxu0 %v695
      %v1696 = vpop.f32.mrb[0].mxu0
      %v1697 = vadd.f32 0.0, %v1696
      %v1698 = vpop.f32.mrb[0].mxu0
      %1699 = vmatprep.mubr.f32.mxu0 0.0
      %1700 = vmatmul.mubr.f32.gmra.mrb[0].mxu0 %v698
      %v1701 = vpop.f32.mrb[0].mxu0
      %v1702 = vadd.f32 0.0, %v1701
      %v1703 = vpop.f32.mrb[0].mxu0
      %1704 = vmatprep.mubr.f32.mxu0 0.0
      %1705 = vmatmul.mubr.f32.gmra.mrb[0].mxu0 %v701
      %v1706 = vpop.f32.mrb[0].mxu0
      %v1707 = vadd.f32 0.0, %v1706
      %v1708 = vpop.f32.mrb[0].mxu0
      %1709 = vmatprep.mubr.f32.mxu0 0.0
      %1710 = vmatmul.mubr.f32.gmra.mrb[0].mxu0 %v704
      %v1711 = vpop.f32.mrb[0].mxu0
      %v1712 = vadd.f32 0.0, %v1711
      %v1713 = vpop.f32.mrb[0].mxu0
      %1714 = vmatprep.mubr.f32.mxu0 0.0
      %1715 = vmatmul.mubr.f32.gmra.mrb[0].mxu0 %v707
      %v1716 = vpop.f32.mrb[0].mxu0
      %v1717 = vadd.f32 0.0, %v1716
      %v1718 = vpop.f32.mrb[0].mxu0
      %1719 = vmatprep.mubr.f32.mxu0 0.0
      %1720 = vmatmul.mubr.f32.gmra.mrb[0].mxu0 %v710
      %v1721 = vpop.f32.mrb[0].mxu0
      %v1722 = vadd.f32 0.0, %v1721
      %v1723 = vpop.f32.mrb[0].mxu0
      %1724 = vmatprep.mubr.f32.mxu0 0.0
      %1725 = vmatmul.mubr.f32.gmra.mrb[0].mxu0 %v713
      %v1726 = vpop.f32.mrb[0].mxu0
      %v1727 = vadd.f32 0.0, %v1726
      %v1728 = vpop.f32.mrb[0].mxu0
      %1729 = vmatprep.mubr.f32.mxu0 0.0
      %1730 = vmatmul.mubr.f32.gmra.mrb[0].mxu0 %v716
      %v1731 = vpop.f32.mrb[0].mxu0
      %v1732 = vadd.f32 0.0, %v1731
      %v1733 = vpop.f32.mrb[0].mxu0
      %1734 = vmatprep.mubr.f32.mxu0 0.0
      %1735 = vmatmul.mubr.f32.gmra.mrb[0].mxu0 %v719
      %v1736 = vpop.f32.mrb[0].mxu0
      %v1737 = vadd.f32 0.0, %v1736
      %v1738 = vpop.f32.mrb[0].mxu0
      %1739 = vmatprep.mubr.f32.mxu0 0.0
      %1740 = vmatmul.mubr.f32.gmra.mrb[0].mxu0 %v722
      %v1741 = vpop.f32.mrb[0].mxu0
      %v1742 = vadd.f32 0.0, %v1741
      %v1743 = vpop.f32.mrb[0].mxu0
      %1744 = vmatprep.mubr.f32.mxu0 0.0
      %1745 = vmatmul.mubr.f32.gmra.mrb[0].mxu0 %v725
      %v1746 = vpop.f32.mrb[0].mxu0
      %v1747 = vadd.f32 0.0, %v1746
      %v1748 = vpop.f32.mrb[0].mxu0
      %1749 = vmatprep.mubr.f32.mxu0 0.0
      %1750 = vmatmul.mubr.f32.gmra.mrb[0].mxu0 %v728
      %v1751 = vpop.f32.mrb[0].mxu0
      %v1752 = vadd.f32 0.0, %v1751
      %v1753 = vpop.f32.mrb[0].mxu0
      %1754 = vmatprep.mubr.f32.mxu0 0.0
      %1755 = vmatmul.mubr.f32.gmra.mrb[0].mxu0 %v731
      %v1756 = vpop.f32.mrb[0].mxu0
      %v1757 = vadd.f32 0.0, %v1756
      %v1758 = vpop.f32.mrb[0].mxu0
      %1759 = vmatprep.mubr.f32.mxu0 0.0
      %1760 = vmatmul.mubr.f32.gmra.mrb[0].mxu0 %v734
      %v1761 = vpop.f32.mrb[0].mxu0
      %v1762 = vadd.f32 0.0, %v1761
      %v1763 = vpop.f32.mrb[0].mxu0
      %1764 = vmatprep.mubr.f32.mxu0 0.0
      %1765 = vmatmul.mubr.f32.gmra.mrb[0].mxu0 %v737
      %v1766 = vpop.f32.mrb[0].mxu0
      %v1767 = vadd.f32 0.0, %v1766
      %v1768 = vpop.f32.mrb[0].mxu0
      %1769 = vmatprep.mubr.f32.mxu0 0.0
      %1770 = vmatmul.mubr.f32.gmra.mrb[0].mxu0 %v740
      %v1771 = vpop.f32.mrb[0].mxu0
      %v1772 = vadd.f32 0.0, %v1771
      %v1773 = vpop.f32.mrb[0].mxu0
      %1774 = vmatprep.mubr.f32.mxu0 0.0
      %1775 = vmatmul.mubr.f32.gmra.mrb[0].mxu0 %v743
      %v1776 = vpop.f32.mrb[0].mxu0
      %v1777 = vadd.f32 0.0, %v1776
      %v1778 = vpop.f32.mrb[0].mxu0
      %1779 = vmatprep.mubr.f32.mxu0 0.0
      %1780 = vmatmul.mubr.f32.gmra.mrb[0].mxu0 %v746
      %v1781 = vpop.f32.mrb[0].mxu0
      %v1782 = vadd.f32 0.0, %v1781
      %v1783 = vpop.f32.mrb[0].mxu0
      %1784 = vmatprep.mubr.f32.mxu0 0.0
      %1785 = vmatmul.mubr.f32.gmra.mrb[0].mxu0 %v749
      %v1786 = vpop.f32.mrb[0].mxu0
      %v1787 = vadd.f32 0.0, %v1786
      %v1788 = vpop.f32.mrb[0].mxu0
      %1789 = vmatprep.mubr.f32.mxu0 0.0
      %1790 = vmatmul.mubr.f32.gmra.mrb[0].mxu0 %v752
      %v1791 = vpop.f32.mrb[0].mxu0
      %v1792 = vadd.f32 0.0, %v1791
      %v1793 = vpop.f32.mrb[0].mxu0
      %1794 = vmatprep.mubr.f32.mxu0 0.0
      %1795 = vmatmul.mubr.f32.gmra.mrb[0].mxu0 %v755
      %v1796 = vpop.f32.mrb[0].mxu0
      %v1797 = vadd.f32 0.0, %v1796
      %v1798 = vpop.f32.mrb[0].mxu0
      %1799 = vmatprep.mubr.f32.mxu0 0.0
      %1800 = vmatmul.mubr.f32.gmra.mrb[0].mxu0 %v758
      %v1801 = vpop.f32.mrb[0].mxu0
      %v1802 = vadd.f32 0.0, %v1801
      %v1803 = vpop.f32.mrb[0].mxu0
      %1804 = vmatprep.mubr.f32.mxu0 0.0
      %1805 = vmatmul.mubr.f32.gmra.mrb[0].mxu0 %v761
      %v1806 = vpop.f32.mrb[0].mxu0
      %v1807 = vadd.f32 0.0, %v1806
      %v1808 = vpop.f32.mrb[0].mxu0
      %1809 = vmatprep.mubr.f32.mxu0 0.0
      %1810 = vmatmul.mubr.f32.gmra.mrb[0].mxu0 %v764
      %v1811 = vpop.f32.mrb[0].mxu0
      %v1812 = vadd.f32 0.0, %v1811
      %v1813 = vpop.f32.mrb[0].mxu0
      %1814 = vmatprep.mubr.f32.mxu0 0.0
      %1815 = vmatmul.mubr.f32.gmra.mrb[0].mxu0 %v767
      %v1816 = vpop.f32.mrb[0].mxu0
      %v1817 = vadd.f32 0.0, %v1816
      %v1818 = vpop.f32.mrb[0].mxu0
      %1819 = vmatprep.mubr.f32.mxu0 0.0
      %1820 = vmatmul.mubr.f32.gmra.mrb[0].mxu0 %v770
      %v1821 = vpop.f32.mrb[0].mxu0
      %v1822 = vadd.f32 0.0, %v1821
      %v1823 = vpop.f32.mrb[0].mxu0
      %1824 = vmatprep.mubr.f32.mxu0 0.0
      %1825 = vmatmul.mubr.f32.gmra.mrb[0].mxu0 %v773
      %v1826 = vpop.f32.mrb[0].mxu0
      %v1827 = vadd.f32 0.0, %v1826
      %v1828 = vpop.f32.mrb[0].mxu0
      %1829 = vmatprep.mubr.f32.mxu0 0.0
      %1830 = vmatmul.mubr.f32.gmra.mrb[0].mxu0 %v776
      %v1831 = vpop.f32.mrb[0].mxu0
      %v1832 = vadd.f32 0.0, %v1831
      %v1833 = vpop.f32.mrb[0].mxu0
      %1834 = vmatprep.mubr.f32.mxu0 0.0
      %1835 = vmatmul.mubr.f32.gmra.mrb[0].mxu0 %v779
      %v1836 = vpop.f32.mrb[0].mxu0
      %v1837 = vadd.f32 0.0, %v1836
      %v1838 = vpop.f32.mrb[0].mxu0
      %1839 = vmatprep.mubr.f32.mxu0 0.0
      %1840 = vmatmul.mubr.f32.gmra.mrb[0].mxu0 %v782
      %v1841 = vpop.f32.mrb[0].mxu0
      %v1842 = vadd.f32 0.0, %v1841
      %v1843 = vpop.f32.mrb[0].mxu0
      %1844 = vmatprep.mubr.f32.mxu0 0.0
      %1845 = vmatmul.mubr.f32.gmra.mrb[0].mxu0 %v785
      %v1846 = vpop.f32.mrb[0].mxu0
      %v1847 = vadd.f32 0.0, %v1846
      %v1848 = vpop.f32.mrb[0].mxu0
      %1849 = vmatprep.mubr.f32.mxu0 0.0
      %1850 = vmatmul.mubr.f32.gmra.mrb[0].mxu0 %v788
      %v1851 = vpop.f32.mrb[0].mxu0
      %v1852 = vadd.f32 0.0, %v1851
      %v1853 = vpop.f32.mrb[0].mxu0
      %1854 = vmatprep.mubr.f32.mxu0 0.0
      %1855 = vmatmul.mubr.f32.gmra.mrb[0].mxu0 %v791
      %v1856 = vpop.f32.mrb[0].mxu0
      %v1857 = vadd.f32 0.0, %v1856
      %v1858 = vpop.f32.mrb[0].mxu0
      %1859 = vmatprep.mubr.f32.mxu0 0.0
      %1860 = vmatmul.mubr.f32.gmra.mrb[0].mxu0 %v794
      %v1861 = vpop.f32.mrb[0].mxu0
      %v1862 = vadd.f32 0.0, %v1861
      %v1863 = vpop.f32.mrb[0].mxu0
      %1864 = vmatprep.mubr.f32.mxu0 0.0
      %1865 = vmatmul.mubr.f32.gmra.mrb[0].mxu0 %v797
      %v1866 = vpop.f32.mrb[0].mxu0
      %v1867 = vadd.f32 0.0, %v1866
      %v1868 = vpop.f32.mrb[0].mxu0
      %1869 = vmatprep.mubr.f32.mxu0 0.0
      %1870 = vmatmul.mubr.f32.gmra.mrb[0].mxu0 %v800
      %v1871 = vpop.f32.mrb[0].mxu0
      %v1872 = vadd.f32 0.0, %v1871
      %v1873 = vpop.f32.mrb[0].mxu0
      %1874 = vmatprep.mubr.f32.mxu0 0.0
      %1875 = vmatmul.mubr.f32.gmra.mrb[0].mxu0 %v803
      %v1876 = vpop.f32.mrb[0].mxu0
      %v1877 = vadd.f32 0.0, %v1876
      %v1878 = vpop.f32.mrb[0].mxu0
      %1879 = vmatprep.mubr.f32.mxu0 0.0
      %1880 = vmatmul.mubr.f32.gmra.mrb[0].mxu0 %v806
      %v1881 = vpop.f32.mrb[0].mxu0
      %v1882 = vadd.f32 0.0, %v1881
      %v1883 = vpop.f32.mrb[0].mxu0
      %1884 = vmatprep.mubr.f32.mxu0 0.0
      %1885 = vmatmul.mubr.f32.gmra.mrb[0].mxu0 %v809
      %v1886 = vpop.f32.mrb[0].mxu0
      %v1887 = vadd.f32 0.0, %v1886
      %v1888 = vpop.f32.mrb[0].mxu0
      %1889 = vmatprep.mubr.f32.mxu0 0.0
      %1890 = vmatmul.mubr.f32.gmra.mrb[0].mxu0 %v812
      %v1891 = vpop.f32.mrb[0].mxu0
      %v1892 = vadd.f32 0.0, %v1891
      %v1893 = vpop.f32.mrb[0].mxu0
      %1894 = vmatprep.mubr.f32.mxu0 0.0
      %1895 = vmatmul.mubr.f32.gmra.mrb[0].mxu0 %v815
      %v1896 = vpop.f32.mrb[0].mxu0
      %v1897 = vadd.f32 0.0, %v1896
      %v1898 = vpop.f32.mrb[0].mxu0
      %1899 = vmatprep.mubr.f32.mxu0 0.0
      %1900 = vmatmul.mubr.f32.gmra.mrb[0].mxu0 %v818
      %v1901 = vpop.f32.mrb[0].mxu0
      %v1902 = vadd.f32 0.0, %v1901
      %v1903 = vpop.f32.mrb[0].mxu0
      %1904 = vmatprep.mubr.f32.mxu0 0.0
      %1905 = vmatmul.mubr.f32.gmra.mrb[0].mxu0 %v821
      %v1906 = vpop.f32.mrb[0].mxu0
      %v1907 = vadd.f32 0.0, %v1906
      %v1908 = vpop.f32.mrb[0].mxu0
      %1909 = vmatprep.mubr.f32.mxu0 0.0
      %1910 = vmatmul.mubr.f32.gmra.mrb[0].mxu0 %v824
      %v1911 = vpop.f32.mrb[0].mxu0
      %v1912 = vadd.f32 0.0, %v1911
      %v1913 = vpop.f32.mrb[0].mxu0
      %1914 = vmatprep.mubr.f32.mxu0 0.0
      %1915 = vmatmul.mubr.f32.gmra.mrb[0].mxu0 %v827
      %v1916 = vpop.f32.mrb[0].mxu0
      %v1917 = vadd.f32 0.0, %v1916
      %v1918 = vpop.f32.mrb[0].mxu0
      %1919 = vmatprep.mubr.f32.mxu0 0.0
      %1920 = vmatmul.mubr.f32.gmra.mrb[0].mxu0 %v830
      %v1921 = vpop.f32.mrb[0].mxu0
      %v1922 = vadd.f32 0.0, %v1921
      %v1923 = vpop.f32.mrb[0].mxu0
      %1924 = vmatprep.mubr.f32.mxu0 0.0
      %1925 = vmatmul.mubr.f32.gmra.mrb[0].mxu0 %v833
      %v1926 = vpop.f32.mrb[0].mxu0
      %v1927 = vadd.f32 0.0, %v1926
      %v1928 = vpop.f32.mrb[0].mxu0
      %1929 = vmatprep.mubr.f32.mxu0 0.0
      %1930 = vmatmul.mubr.f32.gmra.mrb[0].mxu0 %v836
      %v1931 = vpop.f32.mrb[0].mxu0
      %v1932 = vadd.f32 0.0, %v1931
      %v1933 = vpop.f32.mrb[0].mxu0
      %1934 = vmatprep.mubr.f32.mxu0 0.0
      %1935 = vmatmul.mubr.f32.gmra.mrb[0].mxu0 %v839
      %v1936 = vpop.f32.mrb[0].mxu0
      %v1937 = vadd.f32 0.0, %v1936
      %v1938 = vpop.f32.mrb[0].mxu0
      %1939 = vmatprep.mubr.f32.mxu0 0.0
      %1940 = vmatmul.mubr.f32.gmra.mrb[0].mxu0 %v842
      %v1941 = vpop.f32.mrb[0].mxu0
      %v1942 = vadd.f32 0.0, %v1941
      %v1943 = vpop.f32.mrb[0].mxu0
      %1944 = vmatprep.mubr.f32.mxu0 0.0
      %1945 = vmatmul.mubr.f32.gmra.mrb[0].mxu0 %v845
      %v1946 = vpop.f32.mrb[0].mxu0
      %v1947 = vadd.f32 0.0, %v1946
      %v1948 = vpop.f32.mrb[0].mxu0
      %1949 = vmatprep.mubr.f32.mxu0 0.0
      %1950 = vmatmul.mubr.f32.gmra.mrb[0].mxu0 %v848
      %v1951 = vpop.f32.mrb[0].mxu0
      %v1952 = vadd.f32 0.0, %v1951
      %v1953 = vpop.f32.mrb[0].mxu0
      %1954 = vmatprep.mubr.f32.mxu0 0.0
      %1955 = vmatmul.mubr.f32.gmra.mrb[0].mxu0 %v851
      %v1956 = vpop.f32.mrb[0].mxu0
      %v1957 = vadd.f32 0.0, %v1956
      %v1958 = vpop.f32.mrb[0].mxu0
      %1959 = vmatprep.mubr.f32.mxu0 0.0
      %1960 = vmatmul.mubr.f32.gmra.mrb[0].mxu0 %v854
      %v1961 = vpop.f32.mrb[0].mxu0
      %v1962 = vadd.f32 0.0, %v1961
      %v1963 = vpop.f32.mrb[0].mxu0
      %1964 = vmatprep.mubr.f32.mxu0 0.0
      %1965 = vmatmul.mubr.f32.gmra.mrb[0].mxu0 %v857
      %v1966 = vpop.f32.mrb[0].mxu0
      %v1967 = vadd.f32 0.0, %v1966
      %v1968 = vpop.f32.mrb[0].mxu0
      %1969 = vmatprep.mubr.f32.mxu0 0.0
      %1970 = vmatmul.mubr.f32.gmra.mrb[0].mxu0 %v860
      %v1971 = vpop.f32.mrb[0].mxu0
      %v1972 = vadd.f32 0.0, %v1971
      %v1973 = vpop.f32.mrb[0].mxu0
      %1974 = vmatprep.mubr.f32.mxu0 0.0
      %1975 = vmatmul.mubr.f32.gmra.mrb[0].mxu0 %v863
      %v1976 = vpop.f32.mrb[0].mxu0
      %v1977 = vadd.f32 0.0, %v1976
      %v1978 = vpop.f32.mrb[0].mxu0
      %1979 = vmatprep.mubr.f32.mxu0 0.0
      %1980 = vmatmul.mubr.f32.gmra.mrb[0].mxu0 %v866
      %v1981 = vpop.f32.mrb[0].mxu0
      %v1982 = vadd.f32 0.0, %v1981
      %v1983 = vpop.f32.mrb[0].mxu0
      %1984 = vmatprep.mubr.f32.mxu0 0.0
      %1985 = vmatmul.mubr.f32.gmra.mrb[0].mxu0 %v869
      %v1986 = vpop.f32.mrb[0].mxu0
      %v1987 = vadd.f32 0.0, %v1986
      %v1988 = vpop.f32.mrb[0].mxu0
      %1989 = vmatprep.mubr.f32.mxu0 0.0
      %1990 = vmatmul.mubr.f32.gmra.mrb[0].mxu0 %v872
      %v1991 = vpop.f32.mrb[0].mxu0
      %v1992 = vadd.f32 0.0, %v1991
      %v1993 = vpop.f32.mrb[0].mxu0
      %1994 = vmatprep.mubr.f32.mxu0 0.0
      %1995 = vmatmul.mubr.f32.gmra.mrb[0].mxu0 %v875
      %v1996 = vpop.f32.mrb[0].mxu0
      %v1997 = vadd.f32 0.0, %v1996
      %v1998 = vpop.f32.mrb[0].mxu0
      %1999 = vmatprep.mubr.f32.mxu0 0.0
      %2000 = vmatmul.mubr.f32.gmra.mrb[0].mxu0 %v878
      %v2001 = vpop.f32.mrb[0].mxu0
      %v2002 = vadd.f32 0.0, %v2001
      %v2003 = vpop.f32.mrb[0].mxu0
      %2004 = vmatprep.mubr.f32.mxu0 0.0
      %2005 = vmatmul.mubr.f32.gmra.mrb[0].mxu0 %v881
      %v2006 = vpop.f32.mrb[0].mxu0
      %v2007 = vadd.f32 0.0, %v2006
      %v2008 = vpop.f32.mrb[0].mxu0
      %2009 = vmatprep.mubr.f32.mxu0 0.0
      %2010 = vmatmul.mubr.f32.gmra.mrb[0].mxu0 %v884
      %v2011 = vpop.f32.mrb[0].mxu0
      %v2012 = vadd.f32 0.0, %v2011
      %v2013 = vpop.f32.mrb[0].mxu0
      %2014 = vmatprep.mubr.f32.mxu0 0.0
      %2015 = vmatmul.mubr.f32.gmra.mrb[0].mxu0 %v887
      %v2016 = vpop.f32.mrb[0].mxu0
      %v2017 = vadd.f32 0.0, %v2016
      %v2018 = vpop.f32.mrb[0].mxu0
      %2019 = vmatprep.mubr.f32.mxu0 0.0
      %2020 = vmatmul.mubr.f32.gmra.mrb[0].mxu0 %v890
      %v2021 = vpop.f32.mrb[0].mxu0
      %v2022 = vadd.f32 0.0, %v2021
      %v2023 = vpop.f32.mrb[0].mxu0
      %2024 = vmatprep.mubr.f32.mxu0 0.0
      %2025 = vmatmul.mubr.f32.gmra.mrb[0].mxu0 %v893
      %v2026 = vpop.f32.mrb[0].mxu0
      %v2027 = vadd.f32 0.0, %v2026
      %v2028 = vpop.f32.mrb[0].mxu0
      %2029 = vmatprep.mubr.f32.mxu0 0.0
      %2030 = vmatmul.mubr.f32.gmra.mrb[0].mxu0 %v896
      %v2031 = vpop.f32.mrb[0].mxu0
      %v2032 = vadd.f32 0.0, %v2031
      %v2033 = vpop.f32.mrb[0].mxu0
      %2034 = vmatprep.mubr.f32.mxu0 0.0
      %2035 = vmatmul.mubr.f32.gmra.mrb[0].mxu0 %v899
      %v2036 = vpop.f32.mrb[0].mxu0
      %v2037 = vadd.f32 0.0, %v2036
      %v2038 = vpop.f32.mrb[0].mxu0
      %2039 = vmatprep.mubr.f32.mxu0 0.0
      %2040 = vmatmul.mubr.f32.gmra.mrb[0].mxu0 %v902
      %v2041 = vpop.f32.mrb[0].mxu0
      %v2042 = vadd.f32 0.0, %v2041
      %v2043 = vpop.f32.mrb[0].mxu0
      %2044 = vmatprep.mubr.f32.mxu0 0.0
      %2045 = vmatmul.mubr.f32.gmra.mrb[0].mxu0 %v905
      %v2046 = vpop.f32.mrb[0].mxu0
      %v2047 = vadd.f32 0.0, %v2046
      %v2048 = vpop.f32.mrb[0].mxu0
      %2049 = vmatprep.mubr.f32.mxu0 0.0
      %2050 = vmatmul.mubr.f32.gmra.mrb[0].mxu0 %v908
      %v2051 = vpop.f32.mrb[0].mxu0
      %v2052 = vadd.f32 0.0, %v2051
      %v2053 = vpop.f32.mrb[0].mxu0
      %2054 = vmatprep.mubr.f32.mxu0 0.0
      %2055 = vmatmul.mubr.f32.gmra.mrb[0].mxu0 %v911
      %v2056 = vpop.f32.mrb[0].mxu0
      %v2057 = vadd.f32 0.0, %v2056
      %v2058 = vpop.f32.mrb[0].mxu0
      %2059 = vmatprep.mubr.f32.mxu0 0.0
      %2060 = vmatmul.mubr.f32.gmra.mrb[0].mxu0 %v914
      %v2061 = vpop.f32.mrb[0].mxu0
      %v2062 = vadd.f32 0.0, %v2061
      %v2063 = vpop.f32.mrb[0].mxu0
      %2064 = vmatprep.mubr.f32.mxu0 0.0
      %2065 = vmatmul.mubr.f32.gmra.mrb[0].mxu0 %v917
      %v2066 = vpop.f32.mrb[0].mxu0
      %v2067 = vadd.f32 0.0, %v2066
      %v2068 = vpop.f32.mrb[0].mxu0
      %2069 = vmatprep.mubr.f32.mxu0 0.0
      %2070 = vmatmul.mubr.f32.gmra.mrb[0].mxu0 %v920
      %v2071 = vpop.f32.mrb[0].mxu0
      %v2072 = vadd.f32 0.0, %v2071
      %v2073 = vpop.f32.mrb[0].mxu0
      %2074 = vmatprep.mubr.f32.mxu0 0.0
      %2075 = vmatmul.mubr.f32.gmra.mrb[0].mxu0 %v923
      %v2076 = vpop.f32.mrb[0].mxu0
      %v2077 = vadd.f32 0.0, %v2076
      %v2078 = vpop.f32.mrb[0].mxu0
      %2079 = vmatprep.mubr.f32.mxu0 0.0
      %2080 = vmatmul.mubr.f32.gmra.mrb[0].mxu0 %v926
      %v2081 = vpop.f32.mrb[0].mxu0
      %v2082 = vadd.f32 0.0, %v2081
      %v2083 = vpop.f32.mrb[0].mxu0
      %2084 = vmatprep.mubr.f32.mxu0 0.0
      %2085 = vmatmul.mubr.f32.gmra.mrb[0].mxu0 %v929
      %v2086 = vpop.f32.mrb[0].mxu0
      %v2087 = vadd.f32 0.0, %v2086
      %v2088 = vpop.f32.mrb[0].mxu0
      %2089 = vmatprep.mubr.f32.mxu0 0.0
      %2090 = vmatmul.mubr.f32.gmra.mrb[0].mxu0 %v932
      %v2091 = vpop.f32.mrb[0].mxu0
      %v2092 = vadd.f32 0.0, %v2091
      %v2093 = vpop.f32.mrb[0].mxu0
      %2094 = vmatprep.mubr.f32.mxu0 0.0
      %2095 = vmatmul.mubr.f32.gmra.mrb[0].mxu0 %v935
      %v2096 = vpop.f32.mrb[0].mxu0
      %v2097 = vadd.f32 0.0, %v2096
      %v2098 = vpop.f32.mrb[0].mxu0
      %2099 = vmatprep.mubr.f32.mxu0 0.0
      %2100 = vmatmul.mubr.f32.gmra.mrb[0].mxu0 %v938
      %v2101 = vpop.f32.mrb[0].mxu0
      %v2102 = vadd.f32 0.0, %v2101
      %v2103 = vpop.f32.mrb[0].mxu0
      %2104 = vmatprep.mubr.f32.mxu0 0.0
      %2105 = vmatmul.mubr.f32.gmra.mrb[0].mxu0 %v941
      %v2106 = vpop.f32.mrb[0].mxu0
      %v2107 = vadd.f32 0.0, %v2106
      %v2108 = vpop.f32.mrb[0].mxu0
      %2109 = vmatprep.mubr.f32.mxu0 0.0
      %2110 = vmatmul.mubr.f32.gmra.mrb[0].mxu0 %v944
      %v2111 = vpop.f32.mrb[0].mxu0
      %v2112 = vadd.f32 0.0, %v2111
      %v2113 = vpop.f32.mrb[0].mxu0
      %2114 = vmatprep.mubr.f32.mxu0 0.0
      %2115 = vmatmul.mubr.f32.gmra.mrb[0].mxu0 %v947
      %v2116 = vpop.f32.mrb[0].mxu0
      %v2117 = vadd.f32 0.0, %v2116
      %v2118 = vpop.f32.mrb[0].mxu0
      %2119 = vmatprep.mubr.f32.mxu0 0.0
      %2120 = vmatmul.mubr.f32.gmra.mrb[0].mxu0 %v950
      %v2121 = vpop.f32.mrb[0].mxu0
      %v2122 = vadd.f32 0.0, %v2121
      %v2123 = vpop.f32.mrb[0].mxu0
      %2124 = vmatprep.mubr.f32.mxu0 0.0
      %2125 = vmatmul.mubr.f32.gmra.mrb[0].mxu0 %v953
      %v2126 = vpop.f32.mrb[0].mxu0
      %v2127 = vadd.f32 0.0, %v2126
      %v2128 = vpop.f32.mrb[0].mxu0
      %2129 = vmatprep.mubr.f32.mxu0 0.0
      %2130 = vmatmul.mubr.f32.gmra.mrb[0].mxu0 %v956
      %v2131 = vpop.f32.mrb[0].mxu0
      %v2132 = vadd.f32 0.0, %v2131
      %v2133 = vpop.f32.mrb[0].mxu0
      %2134 = vmatprep.mubr.f32.mxu0 0.0
      %2135 = vmatmul.mubr.f32.gmra.mrb[0].mxu0 %v959
      %v2136 = vpop.f32.mrb[0].mxu0
      %v2137 = vadd.f32 0.0, %v2136
      %v2138 = vpop.f32.mrb[0].mxu0
      %2139 = vmatprep.mubr.f32.mxu0 0.0
      %2140 = vmatmul.mubr.f32.gmra.mrb[0].mxu0 %v962
      %v2141 = vpop.f32.mrb[0].mxu0
      %v2142 = vadd.f32 0.0, %v2141
      %v2143 = vpop.f32.mrb[0].mxu0
      %2144 = vmatprep.mubr.f32.mxu0 0.0
      %2145 = vmatmul.mubr.f32.gmra.mrb[0].mxu0 %v965
      %v2146 = vpop.f32.mrb[0].mxu0
      %v2147 = vadd.f32 0.0, %v2146
      %v2148 = vpop.f32.mrb[0].mxu0
      %2149 = vmatprep.mubr.f32.mxu0 0.0
      %2150 = vmatmul.mubr.f32.gmra.mrb[0].mxu0 %v968
      %v2151 = vpop.f32.mrb[0].mxu0
      %v2152 = vadd.f32 0.0, %v2151
      %v2153 = vpop.f32.mrb[0].mxu0
      %2154 = vmatprep.mubr.f32.mxu0 0.0
      %2155 = vmatmul.mubr.f32.gmra.mrb[0].mxu0 %v971
      %v2156 = vpop.f32.mrb[0].mxu0
      %v2157 = vadd.f32 0.0, %v2156
      %v2158 = vpop.f32.mrb[0].mxu0
      %2159 = vmatprep.mubr.f32.mxu0 0.0
      %2160 = vmatmul.mubr.f32.gmra.mrb[0].mxu0 %v974
      %v2161 = vpop.f32.mrb[0].mxu0
      %v2162 = vadd.f32 0.0, %v2161
      %v2163 = vpop.f32.mrb[0].mxu0
      %2164 = vmatprep.mubr.f32.mxu0 0.0
      %2165 = vmatmul.mubr.f32.gmra.mrb[0].mxu0 %v977
      %v2166 = vpop.f32.mrb[0].mxu0
      %v2167 = vadd.f32 0.0, %v2166
      %v2168 = vpop.f32.mrb[0].mxu0
      %2169 = vmatprep.mubr.f32.mxu0 0.0
      %2170 = vmatmul.mubr.f32.gmra.mrb[0].mxu0 %v980
      %v2171 = vpop.f32.mrb[0].mxu0
      %v2172 = vadd.f32 0.0, %v2171
      %v2173 = vpop.f32.mrb[0].mxu0
      %2174 = vmatprep.mubr.f32.mxu0 0.0
      %2175 = vmatmul.mubr.f32.gmra.mrb[0].mxu0 %v983
      %v2176 = vpop.f32.mrb[0].mxu0
      %v2177 = vadd.f32 0.0, %v2176
      %v2178 = vpop.f32.mrb[0].mxu0
      %2179 = vmatprep.mubr.f32.mxu0 0.0
      %2180 = vmatmul.mubr.f32.gmra.mrb[0].mxu0 %v986
      %v2181 = vpop.f32.mrb[0].mxu0
      %v2182 = vadd.f32 0.0, %v2181
      %v2183 = vpop.f32.mrb[0].mxu0
      %2184 = vmatprep.mubr.f32.mxu0 0.0
      %2185 = vmatmul.mubr.f32.gmra.mrb[0].mxu0 %v989
      %v2186 = vpop.f32.mrb[0].mxu0
      %v2187 = vadd.f32 0.0, %v2186
      %v2188 = vpop.f32.mrb[0].mxu0
      %2189 = vmatprep.mubr.f32.mxu0 0.0
      %2190 = vmatmul.mubr.f32.gmra.mrb[0].mxu0 %v992
      %v2191 = vpop.f32.mrb[0].mxu0
      %v2192 = vadd.f32 0.0, %v2191
      %v2193 = vpop.f32.mrb[0].mxu0
      %2194 = vmatprep.mubr.f32.mxu0 0.0
      %2195 = vmatmul.mubr.f32.gmra.mrb[0].mxu0 %v995
      %v2196 = vpop.f32.mrb[0].mxu0
      %v2197 = vadd.f32 0.0, %v2196
      %v2198 = vpop.f32.mrb[0].mxu0
      %2199 = vmatprep.mubr.f32.mxu0 0.0
      %2200 = vmatmul.mubr.f32.gmra.mrb[0].mxu0 %v998
      %v2201 = vpop.f32.mrb[0].mxu0
      %v2202 = vadd.f32 0.0, %v2201
      %v2203 = vpop.f32.mrb[0].mxu0
      %2204 = vmatprep.mubr.f32.mxu0 0.0
      %2205 = vmatmul.mubr.f32.gmra.mrb[0].mxu0 %v1001
      %v2206 = vpop.f32.mrb[0].mxu0
      %v2207 = vadd.f32 0.0, %v2206
      %v2208 = vpop.f32.mrb[0].mxu0
      %2209 = vmatprep.mubr.f32.mxu0 0.0
      %2210 = vmatmul.mubr.f32.gmra.mrb[0].mxu0 %v1004
      %v2211 = vpop.f32.mrb[0].mxu0
      %v2212 = vadd.f32 0.0, %v2211
      %v2213 = vpop.f32.mrb[0].mxu0
      %2214 = vmatprep.mubr.f32.mxu0 0.0
      %2215 = vmatmul.mubr.f32.gmra.mrb[0].mxu0 %v1007
      %v2216 = vpop.f32.mrb[0].mxu0
      %v2217 = vadd.f32 0.0, %v2216
      %v2218 = vpop.f32.mrb[0].mxu0
      %2219 = vmatprep.mubr.f32.mxu0 0.0
      %2220 = vmatmul.mubr.f32.gmra.mrb[0].mxu0 %v1010
      %v2221 = vpop.f32.mrb[0].mxu0
      %v2222 = vadd.f32 0.0, %v2221
      %v2223 = vpop.f32.mrb[0].mxu0
      %2224 = vmatprep.mubr.f32.mxu0 0.0
      %2225 = vmatmul.mubr.f32.gmra.mrb[0].mxu0 %v1013
      %v2226 = vpop.f32.mrb[0].mxu0
      %v2227 = vadd.f32 0.0, %v2226
      %v2228 = vpop.f32.mrb[0].mxu0
      %2229 = vmatprep.mubr.f32.mxu0 0.0
      %2230 = vmatmul.mubr.f32.gmra.mrb[0].mxu0 %v1016
      %v2231 = vpop.f32.mrb[0].mxu0
      %v2232 = vadd.f32 0.0, %v2231
      %v2233 = vpop.f32.mrb[0].mxu0
      %2234 = vmatprep.mubr.f32.mxu0 0.0
      %2235 = vmatmul.mubr.f32.gmra.mrb[0].mxu0 %v1019
      %v2236 = vpop.f32.mrb[0].mxu0
      %v2237 = vadd.f32 0.0, %v2236
      %v2238 = vpop.f32.mrb[0].mxu0
      %2239 = vmatprep.mubr.f32.mxu0 0.0
      %2240 = vmatmul.mubr.f32.gmra.mrb[0].mxu0 %v1022
      %v2241 = vpop.f32.mrb[0].mxu0
      %v2242 = vadd.f32 0.0, %v2241
      %v2243 = vpop.f32.mrb[0].mxu0
      %2244 = vmatprep.mubr.f32.mxu0 0.0
      %2245 = vmatmul.mubr.f32.gmra.mrb[0].mxu0 %v1025
      %v2246 = vpop.f32.mrb[0].mxu0
      %v2247 = vadd.f32 0.0, %v2246
      %v2248 = vpop.f32.mrb[0].mxu0
      %2249 = vmatprep.mubr.f32.mxu0 0.0
      %2250 = vmatmul.mubr.f32.gmra.mrb[0].mxu0 %v1028
      %v2251 = vpop.f32.mrb[0].mxu0
      %v2252 = vadd.f32 0.0, %v2251
      %v2253 = vpop.f32.mrb[0].mxu0
      %2254 = vmatprep.mubr.f32.mxu0 0.0
      %2255 = vmatmul.mubr.f32.gmra.mrb[0].mxu0 %v1031
      %v2256 = vpop.f32.mrb[0].mxu0
      %v2257 = vadd.f32 0.0, %v2256
      %v2258 = vpop.f32.mrb[0].mxu0
      %2259 = vmatprep.mubr.f32.mxu0 0.0
      %2260 = vmatmul.mubr.f32.gmra.mrb[0].mxu0 %v1034
      %v2261 = vpop.f32.mrb[0].mxu0
      %v2262 = vadd.f32 0.0, %v2261
      %v2263 = vpop.f32.mrb[0].mxu0
      %2264 = vmatprep.mubr.f32.mxu0 0.0
      %2265 = vmatmul.mubr.f32.gmra.mrb[0].mxu0 %v1037
      %v2266 = vpop.f32.mrb[0].mxu0
      %v2267 = vadd.f32 0.0, %v2266
      %v2268 = vpop.f32.mrb[0].mxu0
      %2269 = vmatprep.mubr.f32.mxu0 0.0
      %2270 = vmatmul.mubr.f32.gmra.mrb[0].mxu0 %v1040
      %v2271 = vpop.f32.mrb[0].mxu0
      %v2272 = vadd.f32 0.0, %v2271
      %v2273 = vpop.f32.mrb[0].mxu0
      %2274 = vmatprep.mubr.f32.mxu0 0.0
      %2275 = vmatmul.mubr.f32.gmra.mrb[0].mxu0 %v1043
      %v2276 = vpop.f32.mrb[0].mxu0
      %v2277 = vadd.f32 0.0, %v2276
      %v2278 = vpop.f32.mrb[0].mxu0
      %2279 = vmatprep.mubr.f32.mxu0 0.0
      %2280 = vmatmul.mubr.f32.gmra.mrb[0].mxu0 %v1046
      %v2281 = vpop.f32.mrb[0].mxu0
      %v2282 = vadd.f32 0.0, %v2281
      %v2283 = vpop.f32.mrb[0].mxu0
      %2284 = vmatprep.mubr.f32.mxu0 0.0
      %2285 = vmatmul.mubr.f32.gmra.mrb[0].mxu0 %v1049
      %v2286 = vpop.f32.mrb[0].mxu0
      %v2287 = vadd.f32 0.0, %v2286
      %v2288 = vpop.f32.mrb[0].mxu0
      %2289 = vmatprep.mubr.f32.mxu0 0.0
      %2290 = vmatmul.mubr.f32.gmra.mrb[0].mxu0 %v1052
      %v2291 = vpop.f32.mrb[0].mxu0
      %v2292 = vadd.f32 0.0, %v2291
      %v2293 = vpop.f32.mrb[0].mxu0
      %2294 = vmatprep.mubr.f32.mxu0 0.0
      %2295 = vmatmul.mubr.f32.gmra.mrb[0].mxu0 %v1055
      %v2296 = vpop.f32.mrb[0].mxu0
      %v2297 = vadd.f32 0.0, %v2296
      %v2298 = vpop.f32.mrb[0].mxu0
      %2299 = vmatprep.mubr.f32.mxu0 0.0
      %2300 = vmatmul.mubr.f32.gmra.mrb[0].mxu0 %v1058
      %v2301 = vpop.f32.mrb[0].mxu0
      %v2302 = vadd.f32 0.0, %v2301
      %v2303 = vpop.f32.mrb[0].mxu0
      %2304 = vmatprep.mubr.f32.mxu0 0.0
      %2305 = vmatmul.mubr.f32.gmra.mrb[0].mxu0 %v1061
      %v2306 = vpop.f32.mrb[0].mxu0
      %v2307 = vadd.f32 0.0, %v2306
      %v2308 = vpop.f32.mrb[0].mxu0
      %2309 = vmatprep.mubr.f32.mxu0 0.0
      %2310 = vmatmul.mubr.f32.gmra.mrb[0].mxu0 %v1064
      %v2311 = vpop.f32.mrb[0].mxu0
      %v2312 = vadd.f32 0.0, %v2311
      %v2313 = vpop.f32.mrb[0].mxu0
      %2314 = vmatprep.mubr.f32.mxu0 0.0
      %2315 = vmatmul.mubr.f32.gmra.mrb[0].mxu0 %v1067
      %v2316 = vpop.f32.mrb[0].mxu0
      %v2317 = vadd.f32 0.0, %v2316
      %v2318 = vpop.f32.mrb[0].mxu0
      %2319 = vmatprep.mubr.f32.mxu0 0.0
      %2320 = vmatmul.mubr.f32.gmra.mrb[0].mxu0 %v1070
      %v2321 = vpop.f32.mrb[0].mxu0
      %v2322 = vadd.f32 0.0, %v2321
      %v2323 = vpop.f32.mrb[0].mxu0
      %2324 = vmatprep.mubr.f32.mxu0 0.0
      %2325 = vmatmul.mubr.f32.gmra.mrb[0].mxu0 %v1073
      %v2326 = vpop.f32.mrb[0].mxu0
      %v2327 = vadd.f32 0.0, %v2326
      %v2328 = vpop.f32.mrb[0].mxu0
      %2329 = vmatprep.mubr.f32.mxu0 0.0
      %2330 = vmatmul.mubr.f32.gmra.mrb[0].mxu0 %v1076
      %v2331 = vpop.f32.mrb[0].mxu0
      %v2332 = vadd.f32 0.0, %v2331
      %v2333 = vpop.f32.mrb[0].mxu0
      %2334 = vmatprep.mubr.f32.mxu0 0.0
      %2335 = vmatmul.mubr.f32.gmra.mrb[0].mxu0 %v1079
      %v2336 = vpop.f32.mrb[0].mxu0
      %v2337 = vadd.f32 0.0, %v2336
      %v2338 = vpop.f32.mrb[0].mxu0
      %2339 = vmatprep.mubr.f32.mxu0 0.0
      %2340 = vmatmul.mubr.f32.gmra.mrb[0].mxu0 %v1082
      %v2341 = vpop.f32.mrb[0].mxu0
      %v2342 = vadd.f32 0.0, %v2341
      %v2343 = vpop.f32.mrb[0].mxu0
      %2344 = vmatprep.mubr.f32.mxu0 0.0
      %2345 = vmatmul.mubr.f32.gmra.mrb[0].mxu0 %v1085
      %v2346 = vpop.f32.mrb[0].mxu0
      %v2347 = vadd.f32 0.0, %v2346
      %v2348 = vpop.f32.mrb[0].mxu0
      %2349 = vmatprep.mubr.f32.mxu0 0.0
      %2350 = vmatmul.mubr.f32.gmra.mrb[0].mxu0 %v1088
      %v2351 = vpop.f32.mrb[0].mxu0
      %v2352 = vadd.f32 0.0, %v2351
      %v2353 = vpop.f32.mrb[0].mxu0
      %2354 = vmatprep.mubr.f32.mxu0 0.0
      %2355 = vmatmul.mubr.f32.gmra.mrb[0].mxu0 %v1091
      %v2356 = vpop.f32.mrb[0].mxu0
      %v2357 = vadd.f32 0.0, %v2356
      %v2358 = vpop.f32.mrb[0].mxu0
      %2359 = vmatprep.mubr.f32.mxu0 0.0
      %2360 = vmatmul.mubr.f32.gmra.mrb[0].mxu0 %v1094
      %v2361 = vpop.f32.mrb[0].mxu0
      %v2362 = vadd.f32 0.0, %v2361
      %v2363 = vpop.f32.mrb[0].mxu0
      %2364 = vmatprep.mubr.f32.mxu0 0.0
      %2365 = vmatmul.mubr.f32.gmra.mrb[0].mxu0 %v1097
      %v2366 = vpop.f32.mrb[0].mxu0
      %v2367 = vadd.f32 0.0, %v2366
      %v2368 = vpop.f32.mrb[0].mxu0
      %2369 = vmatprep.mubr.f32.mxu0 0.0
      %2370 = vmatmul.mubr.f32.gmra.mrb[0].mxu0 %v1100
      %v2371 = vpop.f32.mrb[0].mxu0
      %v2372 = vadd.f32 0.0, %v2371
      %v2373 = vpop.f32.mrb[0].mxu0
      %2374 = vmatprep.mubr.f32.mxu0 0.0
      %2375 = vmatmul.mubr.f32.gmra.mrb[0].mxu0 %v1103
      %v2376 = vpop.f32.mrb[0].mxu0
      %v2377 = vadd.f32 0.0, %v2376
      %v2378 = vpop.f32.mrb[0].mxu0
      %2379 = vmatprep.mubr.f32.mxu0 0.0
      %2380 = vmatmul.mubr.f32.gmra.mrb[0].mxu0 %v1106
      %v2381 = vpop.f32.mrb[0].mxu0
      %v2382 = vadd.f32 0.0, %v2381
      %v2383 = vpop.f32.mrb[0].mxu0
      %2384 = vmatprep.mubr.f32.mxu0 0.0
      %2385 = vmatmul.mubr.f32.gmra.mrb[0].mxu0 %v1109
      %v2386 = vpop.f32.mrb[0].mxu0
      %v2387 = vadd.f32 0.0, %v2386
      %v2388 = vpop.f32.mrb[0].mxu0
      %2389 = vmatprep.mubr.f32.mxu0 0.0
      %2390 = vmatmul.mubr.f32.gmra.mrb[0].mxu0 %v1112
      %v2391 = vpop.f32.mrb[0].mxu0
      %v2392 = vadd.f32 0.0, %v2391
      %v2393 = vpop.f32.mrb[0].mxu0
      %2394 = vmatprep.mubr.f32.mxu0 0.0
      %2395 = vmatmul.mubr.f32.gmra.mrb[0].mxu0 %v1115
      %v2396 = vpop.f32.mrb[0].mxu0
      %v2397 = vadd.f32 0.0, %v2396
      %v2398 = vpop.f32.mrb[0].mxu0
      %2399 = vmatprep.mubr.f32.mxu0 0.0
      %2400 = vmatmul.mubr.f32.gmra.mrb[0].mxu0 %v1118
      %v2401 = vpop.f32.mrb[0].mxu0
      %v2402 = vadd.f32 0.0, %v2401
      %v2403 = vpop.f32.mrb[0].mxu0
      %2404 = vmatprep.mubr.f32.mxu0 0.0
      %2405 = vmatmul.mubr.f32.gmra.mrb[0].mxu0 %v1121
      %v2406 = vpop.f32.mrb[0].mxu0
      %v2407 = vadd.f32 0.0, %v2406
      %v2408 = vpop.f32.mrb[0].mxu0
      %2409 = vmatprep.mubr.f32.mxu0 0.0
      %2410 = vmatmul.mubr.f32.gmra.mrb[0].mxu0 %v1124
      %v2411 = vpop.f32.mrb[0].mxu0
      %v2412 = vadd.f32 0.0, %v2411
      %v2413 = vpop.f32.mrb[0].mxu0
      %2414 = vmatprep.mubr.f32.mxu0 0.0
      %2415 = vmatmul.mubr.f32.gmra.mrb[0].mxu0 %v1127
      %v2416 = vpop.f32.mrb[0].mxu0
      %v2417 = vadd.f32 0.0, %v2416
      %v2418 = vpop.f32.mrb[0].mxu0
      %2419 = vmatprep.mubr.f32.mxu0 0.0
      %2420 = vmatmul.mubr.f32.gmra.mrb[0].mxu0 %v1130
      %v2421 = vpop.f32.mrb[0].mxu0
      %v2422 = vadd.f32 0.0, %v2421
      %v2423 = vpop.f32.mrb[0].mxu0
      %2424 = vmatprep.mubr.f32.mxu0 0.0
      %2425 = vmatmul.mubr.f32.gmra.mrb[0].mxu0 %v1133
      %v2426 = vpop.f32.mrb[0].mxu0
      %v2427 = vadd.f32 0.0, %v2426
      %v2428 = vpop.f32.mrb[0].mxu0
      %2429 = vmatprep.mubr.f32.mxu0 0.0
      %2430 = vmatmul.mubr.f32.gmra.mrb[0].mxu0 %v1136
      %v2431 = vpop.f32.mrb[0].mxu0
      %v2432 = vadd.f32 0.0, %v2431
      %v2433 = vpop.f32.mrb[0].mxu0
      %2434 = vmatprep.mubr.f32.mxu0 0.0
      %2435 = vmatmul.mubr.f32.gmra.mrb[0].mxu0 %v1139
      %v2436 = vpop.f32.mrb[0].mxu0
      %v2437 = vadd.f32 0.0, %v2436
      %v2438 = vpop.f32.mrb[0].mxu0
      %2439 = vmatprep.mubr.f32.mxu0 0.0
      %2440 = vmatmul.mubr.f32.gmra.mrb[0].mxu0 %v1142
      %v2441 = vpop.f32.mrb[0].mxu0
      %v2442 = vadd.f32 0.0, %v2441
      %v2443 = vpop.f32.mrb[0].mxu0
      %2444 = vmatprep.mubr.f32.mxu0 0.0
      %2445 = vmatmul.mubr.f32.gmra.mrb[0].mxu0 %v1145
      %v2446 = vpop.f32.mrb[0].mxu0
      %v2447 = vadd.f32 0.0, %v2446
      %v2448 = vpop.f32.mrb[0].mxu0
      %2449 = vmatprep.mubr.f32.mxu0 0.0
      %2450 = vmatmul.mubr.f32.gmra.mrb[0].mxu0 %v1148
      %v2451 = vpop.f32.mrb[0].mxu0
      %v2452 = vadd.f32 0.0, %v2451
      %v2453 = vpop.f32.mrb[0].mxu0
      %2454 = vmatprep.mubr.f32.mxu0 0.0
      %2455 = vmatmul.mubr.f32.gmra.mrb[0].mxu0 %v1151
      %v2456 = vpop.f32.mrb[0].mxu0
      %v2457 = vadd.f32 0.0, %v2456
      %v2458 = vpop.f32.mrb[0].mxu0
      %2459 = vmatprep.mubr.f32.mxu0 0.0
      %2460 = vmatmul.mubr.f32.gmra.mrb[0].mxu0 %v1154
      %v2461 = vpop.f32.mrb[0].mxu0
      %v2462 = vadd.f32 0.0, %v2461
      %v2463 = vpop.f32.mrb[0].mxu0
      %2464 = vmatprep.mubr.f32.mxu0 0.0
      %2465 = vmatmul.mubr.f32.gmra.mrb[0].mxu0 %v1157
      %v2466 = vpop.f32.mrb[0].mxu0
      %v2467 = vadd.f32 0.0, %v2466
      %v2468 = vpop.f32.mrb[0].mxu0
      %2469 = vmatprep.mubr.f32.mxu0 0.0
      %2470 = vmatmul.mubr.f32.gmra.mrb[0].mxu0 %v1160
      %v2471 = vpop.f32.mrb[0].mxu0
      %v2472 = vadd.f32 0.0, %v2471
      %v2473 = vpop.f32.mrb[0].mxu0
      %2474 = vmatprep.mubr.f32.mxu0 0.0
      %2475 = vmatmul.mubr.f32.gmra.mrb[0].mxu0 %v1163
      %v2476 = vpop.f32.mrb[0].mxu0
      %v2477 = vadd.f32 0.0, %v2476
      %v2478 = vpop.f32.mrb[0].mxu0
      %2479 = vmatprep.mubr.f32.mxu0 0.0
      %2480 = vmatmul.mubr.f32.gmra.mrb[0].mxu0 %v1166
      %v2481 = vpop.f32.mrb[0].mxu0
      %v2482 = vadd.f32 0.0, %v2481
      %v2483 = vpop.f32.mrb[0].mxu0
      %2484 = vmatprep.mubr.f32.mxu0 0.0
      %2485 = vmatmul.mubr.f32.gmra.mrb[0].mxu0 %v1169
      %v2486 = vpop.f32.mrb[0].mxu0
      %v2487 = vadd.f32 0.0, %v2486
      %v2488 = vpop.f32.mrb[0].mxu0
      %2489 = vmatprep.mubr.f32.mxu0 0.0
      %2490 = vmatmul.mubr.f32.gmra.mrb[0].mxu0 %v1172
      %v2491 = vpop.f32.mrb[0].mxu0
      %v2492 = vadd.f32 0.0, %v2491
      %v2493 = vpop.f32.mrb[0].mxu0
      %2494 = vmatprep.mubr.f32.mxu0 0.0
      %2495 = vmatmul.mubr.f32.gmra.mrb[0].mxu0 %v1175
      %v2496 = vpop.f32.mrb[0].mxu0
      %v2497 = vadd.f32 0.0, %v2496
      %v2498 = vpop.f32.mrb[0].mxu0
      %2499 = vmatprep.mubr.f32.mxu0 0.0
      %2500 = vmatmul.mubr.f32.gmra.mrb[0].mxu0 %v1178
      %v2501 = vpop.f32.mrb[0].mxu0
      %v2502 = vadd.f32 0.0, %v2501
      %v2503 = vpop.f32.mrb[0].mxu0
      %2504 = vmatprep.mubr.f32.mxu0 0.0
      %2505 = vmatmul.mubr.f32.gmra.mrb[0].mxu0 %v1181
      %v2506 = vpop.f32.mrb[0].mxu0
      %v2507 = vadd.f32 0.0, %v2506
      %v2508 = vpop.f32.mrb[0].mxu0
      %2509 = vmatprep.mubr.f32.mxu0 0.0
      %2510 = vmatmul.mubr.f32.gmra.mrb[0].mxu0 %v1184
      %v2511 = vpop.f32.mrb[0].mxu0
      %v2512 = vadd.f32 0.0, %v2511
      %v2513 = vpop.f32.mrb[0].mxu0
      %2514 = vmatprep.mubr.f32.mxu0 0.0
      %2515 = vmatmul.mubr.f32.gmra.mrb[0].mxu0 %v1187
      %v2516 = vpop.f32.mrb[0].mxu0
      %v2517 = vadd.f32 0.0, %v2516
      %v2518 = vpop.f32.mrb[0].mxu0
      %2519 = vmatprep.mubr.f32.mxu0 0.0
      %2520 = vmatmul.mubr.f32.gmra.mrb[0].mxu0 %v1190
      %v2521 = vpop.f32.mrb[0].mxu0
      %v2522 = vadd.f32 0.0, %v2521
      %v2523 = vpop.f32.mrb[0].mxu0
      %2524 = vmatprep.mubr.f32.mxu0 0.0
      %2525 = vmatmul.mubr.f32.gmra.mrb[0].mxu0 %v1193
      %v2526 = vpop.f32.mrb[0].mxu0
      %v2527 = vadd.f32 0.0, %v2526
      %v2528 = vpop.f32.mrb[0].mxu0
      %2529 = vmatprep.mubr.f32.mxu0 0.0
      %2530 = vmatmul.mubr.f32.gmra.mrb[0].mxu0 %v1196
      %v2531 = vpop.f32.mrb[0].mxu0
      %v2532 = vadd.f32 0.0, %v2531
      %v2533 = vpop.f32.mrb[0].mxu0
      %2534 = vmatprep.mubr.f32.mxu0 0.0
      %2535 = vmatmul.mubr.f32.gmra.mrb[0].mxu0 %v1199
      %v2536 = vpop.f32.mrb[0].mxu0
      %v2537 = vadd.f32 0.0, %v2536
      %v2538 = vpop.f32.mrb[0].mxu0
      %2539 = vmatprep.mubr.f32.mxu0 0.0
      %2540 = vmatmul.mubr.f32.gmra.mrb[0].mxu0 %v1202
      %v2541 = vpop.f32.mrb[0].mxu0
      %v2542 = vadd.f32 0.0, %v2541
      %v2543 = vpop.f32.mrb[0].mxu0
      %2544 = vmatprep.mubr.f32.mxu0 0.0
      %2545 = vmatmul.mubr.f32.gmra.mrb[0].mxu0 %v1205
      %v2546 = vpop.f32.mrb[0].mxu0
      %v2547 = vadd.f32 0.0, %v2546
      %v2548 = vpop.f32.mrb[0].mxu0
      %2549 = vmatprep.mubr.f32.mxu0 0.0
      %2550 = vmatmul.mubr.f32.gmra.mrb[0].mxu0 %v1208
      %v2551 = vpop.f32.mrb[0].mxu0
      %v2552 = vadd.f32 0.0, %v2551
      %v2553 = vpop.f32.mrb[0].mxu0
      %2554 = vdwg.mxu0
      %vm2555 = vcmask 7168
      %2556 = vst.msk [vmem:[%s179] sm:$0xff] %vm2555, %v1277
      %2557 = vst.msk [vmem:[%s179 + $0x8] sm:$0xff] %vm2555, %v1282
      %2558 = vst.msk [vmem:[%s179 + $0x10] sm:$0xff] %vm2555, %v1287
      %2559 = vst.msk [vmem:[%s179 + $0x18] sm:$0xff] %vm2555, %v1292
      %2560 = vst.msk [vmem:[%s179 + $0x20] sm:$0xff] %vm2555, %v1297
      %2561 = vst.msk [vmem:[%s179 + $0x28] sm:$0xff] %vm2555, %v1302
      %2562 = vst.msk [vmem:[%s179 + $0x30] sm:$0xff] %vm2555, %v1307
      %2563 = vst.msk [vmem:[%s179 + $0x38] sm:$0xff] %vm2555, %v1312
      %2564 = vst.msk [vmem:[%s179 + $0x40] sm:$0xff] %vm2555, %v1317
      %2565 = vst.msk [vmem:[%s179 + $0x48] sm:$0xff] %vm2555, %v1322
      %2566 = vst.msk [vmem:[%s179 + $0x50] sm:$0xff] %vm2555, %v1327
      %2567 = vst.msk [vmem:[%s179 + $0x58] sm:$0xff] %vm2555, %v1332
      %2568 = vst.msk [vmem:[%s179 + $0x60] sm:$0xff] %vm2555, %v1337
      %2569 = vst.msk [vmem:[%s179 + $0x68] sm:$0xff] %vm2555, %v1342
      %2570 = vst.msk [vmem:[%s179 + $0x70] sm:$0xff] %vm2555, %v1347
      %2571 = vst.msk [vmem:[%s179 + $0x78] sm:$0xff] %vm2555, %v1352
      %2572 = vst.msk [vmem:[%s179 + $0x80] sm:$0xff] %vm2555, %v1357
      %2573 = vst.msk [vmem:[%s179 + $0x88] sm:$0xff] %vm2555, %v1362
      %2574 = vst.msk [vmem:[%s179 + $0x90] sm:$0xff] %vm2555, %v1367
      %2575 = vst.msk [vmem:[%s179 + $0x98] sm:$0xff] %vm2555, %v1372
      %2576 = vst.msk [vmem:[%s179 + $0xa0] sm:$0xff] %vm2555, %v1377
      %2577 = vst.msk [vmem:[%s179 + $0xa8] sm:$0xff] %vm2555, %v1382
      %2578 = vst.msk [vmem:[%s179 + $0xb0] sm:$0xff] %vm2555, %v1387
      %2579 = vst.msk [vmem:[%s179 + $0xb8] sm:$0xff] %vm2555, %v1392
      %2580 = vst.msk [vmem:[%s179 + $0xc0] sm:$0xff] %vm2555, %v1397
      %2581 = vst.msk [vmem:[%s179 + $0xc8] sm:$0xff] %vm2555, %v1402
      %2582 = vst.msk [vmem:[%s179 + $0xd0] sm:$0xff] %vm2555, %v1407
      %2583 = vst.msk [vmem:[%s179 + $0xd8] sm:$0xff] %vm2555, %v1412
      %2584 = vst.msk [vmem:[%s179 + $0xe0] sm:$0xff] %vm2555, %v1417
      %2585 = vst.msk [vmem:[%s179 + $0xe8] sm:$0xff] %vm2555, %v1422
      %2586 = vst.msk [vmem:[%s179 + $0xf0] sm:$0xff] %vm2555, %v1427
      %2587 = vst.msk [vmem:[%s179 + $0xf8] sm:$0xff] %vm2555, %v1432
      %2588 = vst.msk [vmem:[%s179 + $0x100] sm:$0xff] %vm2555, %v1437
      %2589 = vst.msk [vmem:[%s179 + $0x108] sm:$0xff] %vm2555, %v1442
      %2590 = vst.msk [vmem:[%s179 + $0x110] sm:$0xff] %vm2555, %v1447
      %2591 = vst.msk [vmem:[%s179 + $0x118] sm:$0xff] %vm2555, %v1452
      %2592 = vst.msk [vmem:[%s179 + $0x120] sm:$0xff] %vm2555, %v1457
      %2593 = vst.msk [vmem:[%s179 + $0x128] sm:$0xff] %vm2555, %v1462
      %2594 = vst.msk [vmem:[%s179 + $0x130] sm:$0xff] %vm2555, %v1467
      %2595 = vst.msk [vmem:[%s179 + $0x138] sm:$0xff] %vm2555, %v1472
      %2596 = vst.msk [vmem:[%s179 + $0x140] sm:$0xff] %vm2555, %v1477
      %2597 = vst.msk [vmem:[%s179 + $0x148] sm:$0xff] %vm2555, %v1482
      %2598 = vst.msk [vmem:[%s179 + $0x150] sm:$0xff] %vm2555, %v1487
      %2599 = vst.msk [vmem:[%s179 + $0x158] sm:$0xff] %vm2555, %v1492
      %2600 = vst.msk [vmem:[%s179 + $0x160] sm:$0xff] %vm2555, %v1497
      %2601 = vst.msk [vmem:[%s179 + $0x168] sm:$0xff] %vm2555, %v1502
      %2602 = vst.msk [vmem:[%s179 + $0x170] sm:$0xff] %vm2555, %v1507
      %2603 = vst.msk [vmem:[%s179 + $0x178] sm:$0xff] %vm2555, %v1512
      %2604 = vst.msk [vmem:[%s179 + $0x180] sm:$0xff] %vm2555, %v1517
      %2605 = vst.msk [vmem:[%s179 + $0x188] sm:$0xff] %vm2555, %v1522
      %2606 = vst.msk [vmem:[%s179 + $0x190] sm:$0xff] %vm2555, %v1527
      %2607 = vst.msk [vmem:[%s179 + $0x198] sm:$0xff] %vm2555, %v1532
      %2608 = vst.msk [vmem:[%s179 + $0x1a0] sm:$0xff] %vm2555, %v1537
      %2609 = vst.msk [vmem:[%s179 + $0x1a8] sm:$0xff] %vm2555, %v1542
      %2610 = vst.msk [vmem:[%s179 + $0x1b0] sm:$0xff] %vm2555, %v1547
      %2611 = vst.msk [vmem:[%s179 + $0x1b8] sm:$0xff] %vm2555, %v1552
      %2612 = vst.msk [vmem:[%s179 + $0x1c0] sm:$0xff] %vm2555, %v1557
      %2613 = vst.msk [vmem:[%s179 + $0x1c8] sm:$0xff] %vm2555, %v1562
      %2614 = vst.msk [vmem:[%s179 + $0x1d0] sm:$0xff] %vm2555, %v1567
      %2615 = vst.msk [vmem:[%s179 + $0x1d8] sm:$0xff] %vm2555, %v1572
      %2616 = vst.msk [vmem:[%s179 + $0x1e0] sm:$0xff] %vm2555, %v1577
      %2617 = vst.msk [vmem:[%s179 + $0x1e8] sm:$0xff] %vm2555, %v1582
      %2618 = vst.msk [vmem:[%s179 + $0x1f0] sm:$0xff] %vm2555, %v1587
      %2619 = vst.msk [vmem:[%s179 + $0x1f8] sm:$0xff] %vm2555, %v1592
      %2620 = vst.msk [vmem:[%s179 + $0x200] sm:$0xff] %vm2555, %v1597
      %2621 = vst.msk [vmem:[%s179 + $0x208] sm:$0xff] %vm2555, %v1602
      %2622 = vst.msk [vmem:[%s179 + $0x210] sm:$0xff] %vm2555, %v1607
      %2623 = vst.msk [vmem:[%s179 + $0x218] sm:$0xff] %vm2555, %v1612
      %2624 = vst.msk [vmem:[%s179 + $0x220] sm:$0xff] %vm2555, %v1617
      %2625 = vst.msk [vmem:[%s179 + $0x228] sm:$0xff] %vm2555, %v1622
      %2626 = vst.msk [vmem:[%s179 + $0x230] sm:$0xff] %vm2555, %v1627
      %2627 = vst.msk [vmem:[%s179 + $0x238] sm:$0xff] %vm2555, %v1632
      %2628 = vst.msk [vmem:[%s179 + $0x240] sm:$0xff] %vm2555, %v1637
      %2629 = vst.msk [vmem:[%s179 + $0x248] sm:$0xff] %vm2555, %v1642
      %2630 = vst.msk [vmem:[%s179 + $0x250] sm:$0xff] %vm2555, %v1647
      %2631 = vst.msk [vmem:[%s179 + $0x258] sm:$0xff] %vm2555, %v1652
      %2632 = vst.msk [vmem:[%s179 + $0x260] sm:$0xff] %vm2555, %v1657
      %2633 = vst.msk [vmem:[%s179 + $0x268] sm:$0xff] %vm2555, %v1662
      %2634 = vst.msk [vmem:[%s179 + $0x270] sm:$0xff] %vm2555, %v1667
      %2635 = vst.msk [vmem:[%s179 + $0x278] sm:$0xff] %vm2555, %v1672
      %2636 = vst.msk [vmem:[%s179 + $0x280] sm:$0xff] %vm2555, %v1677
      %2637 = vst.msk [vmem:[%s179 + $0x288] sm:$0xff] %vm2555, %v1682
      %2638 = vst.msk [vmem:[%s179 + $0x290] sm:$0xff] %vm2555, %v1687
      %2639 = vst.msk [vmem:[%s179 + $0x298] sm:$0xff] %vm2555, %v1692
      %2640 = vst.msk [vmem:[%s179 + $0x2a0] sm:$0xff] %vm2555, %v1697
      %2641 = vst.msk [vmem:[%s179 + $0x2a8] sm:$0xff] %vm2555, %v1702
      %2642 = vst.msk [vmem:[%s179 + $0x2b0] sm:$0xff] %vm2555, %v1707
      %2643 = vst.msk [vmem:[%s179 + $0x2b8] sm:$0xff] %vm2555, %v1712
      %2644 = vst.msk [vmem:[%s179 + $0x2c0] sm:$0xff] %vm2555, %v1717
      %2645 = vst.msk [vmem:[%s179 + $0x2c8] sm:$0xff] %vm2555, %v1722
      %2646 = vst.msk [vmem:[%s179 + $0x2d0] sm:$0xff] %vm2555, %v1727
      %2647 = vst.msk [vmem:[%s179 + $0x2d8] sm:$0xff] %vm2555, %v1732
      %2648 = vst.msk [vmem:[%s179 + $0x2e0] sm:$0xff] %vm2555, %v1737
      %2649 = vst.msk [vmem:[%s179 + $0x2e8] sm:$0xff] %vm2555, %v1742
      %2650 = vst.msk [vmem:[%s179 + $0x2f0] sm:$0xff] %vm2555, %v1747
      %2651 = vst.msk [vmem:[%s179 + $0x2f8] sm:$0xff] %vm2555, %v1752
      %2652 = vst.msk [vmem:[%s179 + $0x300] sm:$0xff] %vm2555, %v1757
      %2653 = vst.msk [vmem:[%s179 + $0x308] sm:$0xff] %vm2555, %v1762
      %2654 = vst.msk [vmem:[%s179 + $0x310] sm:$0xff] %vm2555, %v1767
      %2655 = vst.msk [vmem:[%s179 + $0x318] sm:$0xff] %vm2555, %v1772
      %2656 = vst.msk [vmem:[%s179 + $0x320] sm:$0xff] %vm2555, %v1777
      %2657 = vst.msk [vmem:[%s179 + $0x328] sm:$0xff] %vm2555, %v1782
      %2658 = vst.msk [vmem:[%s179 + $0x330] sm:$0xff] %vm2555, %v1787
      %2659 = vst.msk [vmem:[%s179 + $0x338] sm:$0xff] %vm2555, %v1792
      %2660 = vst.msk [vmem:[%s179 + $0x340] sm:$0xff] %vm2555, %v1797
      %2661 = vst.msk [vmem:[%s179 + $0x348] sm:$0xff] %vm2555, %v1802
      %2662 = vst.msk [vmem:[%s179 + $0x350] sm:$0xff] %vm2555, %v1807
      %2663 = vst.msk [vmem:[%s179 + $0x358] sm:$0xff] %vm2555, %v1812
      %2664 = vst.msk [vmem:[%s179 + $0x360] sm:$0xff] %vm2555, %v1817
      %2665 = vst.msk [vmem:[%s179 + $0x368] sm:$0xff] %vm2555, %v1822
      %2666 = vst.msk [vmem:[%s179 + $0x370] sm:$0xff] %vm2555, %v1827
      %2667 = vst.msk [vmem:[%s179 + $0x378] sm:$0xff] %vm2555, %v1832
      %2668 = vst.msk [vmem:[%s179 + $0x380] sm:$0xff] %vm2555, %v1837
      %2669 = vst.msk [vmem:[%s179 + $0x388] sm:$0xff] %vm2555, %v1842
      %2670 = vst.msk [vmem:[%s179 + $0x390] sm:$0xff] %vm2555, %v1847
      %2671 = vst.msk [vmem:[%s179 + $0x398] sm:$0xff] %vm2555, %v1852
      %2672 = vst.msk [vmem:[%s179 + $0x3a0] sm:$0xff] %vm2555, %v1857
      %2673 = vst.msk [vmem:[%s179 + $0x3a8] sm:$0xff] %vm2555, %v1862
      %2674 = vst.msk [vmem:[%s179 + $0x3b0] sm:$0xff] %vm2555, %v1867
      %2675 = vst.msk [vmem:[%s179 + $0x3b8] sm:$0xff] %vm2555, %v1872
      %2676 = vst.msk [vmem:[%s179 + $0x3c0] sm:$0xff] %vm2555, %v1877
      %2677 = vst.msk [vmem:[%s179 + $0x3c8] sm:$0xff] %vm2555, %v1882
      %2678 = vst.msk [vmem:[%s179 + $0x3d0] sm:$0xff] %vm2555, %v1887
      %2679 = vst.msk [vmem:[%s179 + $0x3d8] sm:$0xff] %vm2555, %v1892
      %2680 = vst.msk [vmem:[%s179 + $0x3e0] sm:$0xff] %vm2555, %v1897
      %2681 = vst.msk [vmem:[%s179 + $0x3e8] sm:$0xff] %vm2555, %v1902
      %2682 = vst.msk [vmem:[%s179 + $0x3f0] sm:$0xff] %vm2555, %v1907
      %2683 = vst.msk [vmem:[%s179 + $0x3f8] sm:$0xff] %vm2555, %v1912
      %2684 = vst.msk [vmem:[%s179 + $0x400] sm:$0xff] %vm2555, %v1917
      %2685 = vst.msk [vmem:[%s179 + $0x408] sm:$0xff] %vm2555, %v1922
      %2686 = vst.msk [vmem:[%s179 + $0x410] sm:$0xff] %vm2555, %v1927
      %2687 = vst.msk [vmem:[%s179 + $0x418] sm:$0xff] %vm2555, %v1932
      %2688 = vst.msk [vmem:[%s179 + $0x420] sm:$0xff] %vm2555, %v1937
      %2689 = vst.msk [vmem:[%s179 + $0x428] sm:$0xff] %vm2555, %v1942
      %2690 = vst.msk [vmem:[%s179 + $0x430] sm:$0xff] %vm2555, %v1947
      %2691 = vst.msk [vmem:[%s179 + $0x438] sm:$0xff] %vm2555, %v1952
      %2692 = vst.msk [vmem:[%s179 + $0x440] sm:$0xff] %vm2555, %v1957
      %2693 = vst.msk [vmem:[%s179 + $0x448] sm:$0xff] %vm2555, %v1962
      %2694 = vst.msk [vmem:[%s179 + $0x450] sm:$0xff] %vm2555, %v1967
      %2695 = vst.msk [vmem:[%s179 + $0x458] sm:$0xff] %vm2555, %v1972
      %2696 = vst.msk [vmem:[%s179 + $0x460] sm:$0xff] %vm2555, %v1977
      %2697 = vst.msk [vmem:[%s179 + $0x468] sm:$0xff] %vm2555, %v1982
      %2698 = vst.msk [vmem:[%s179 + $0x470] sm:$0xff] %vm2555, %v1987
      %2699 = vst.msk [vmem:[%s179 + $0x478] sm:$0xff] %vm2555, %v1992
      %2700 = vst.msk [vmem:[%s179 + $0x480] sm:$0xff] %vm2555, %v1997
      %2701 = vst.msk [vmem:[%s179 + $0x488] sm:$0xff] %vm2555, %v2002
      %2702 = vst.msk [vmem:[%s179 + $0x490] sm:$0xff] %vm2555, %v2007
      %2703 = vst.msk [vmem:[%s179 + $0x498] sm:$0xff] %vm2555, %v2012
      %2704 = vst.msk [vmem:[%s179 + $0x4a0] sm:$0xff] %vm2555, %v2017
      %2705 = vst.msk [vmem:[%s179 + $0x4a8] sm:$0xff] %vm2555, %v2022
      %2706 = vst.msk [vmem:[%s179 + $0x4b0] sm:$0xff] %vm2555, %v2027
      %2707 = vst.msk [vmem:[%s179 + $0x4b8] sm:$0xff] %vm2555, %v2032
      %2708 = vst.msk [vmem:[%s179 + $0x4c0] sm:$0xff] %vm2555, %v2037
      %2709 = vst.msk [vmem:[%s179 + $0x4c8] sm:$0xff] %vm2555, %v2042
      %2710 = vst.msk [vmem:[%s179 + $0x4d0] sm:$0xff] %vm2555, %v2047
      %2711 = vst.msk [vmem:[%s179 + $0x4d8] sm:$0xff] %vm2555, %v2052
      %2712 = vst.msk [vmem:[%s179 + $0x4e0] sm:$0xff] %vm2555, %v2057
      %2713 = vst.msk [vmem:[%s179 + $0x4e8] sm:$0xff] %vm2555, %v2062
      %2714 = vst.msk [vmem:[%s179 + $0x4f0] sm:$0xff] %vm2555, %v2067
      %2715 = vst.msk [vmem:[%s179 + $0x4f8] sm:$0xff] %vm2555, %v2072
      %2716 = vst.msk [vmem:[%s179 + $0x500] sm:$0xff] %vm2555, %v2077
      %2717 = vst.msk [vmem:[%s179 + $0x508] sm:$0xff] %vm2555, %v2082
      %2718 = vst.msk [vmem:[%s179 + $0x510] sm:$0xff] %vm2555, %v2087
      %2719 = vst.msk [vmem:[%s179 + $0x518] sm:$0xff] %vm2555, %v2092
      %2720 = vst.msk [vmem:[%s179 + $0x520] sm:$0xff] %vm2555, %v2097
      %2721 = vst.msk [vmem:[%s179 + $0x528] sm:$0xff] %vm2555, %v2102
      %2722 = vst.msk [vmem:[%s179 + $0x530] sm:$0xff] %vm2555, %v2107
      %2723 = vst.msk [vmem:[%s179 + $0x538] sm:$0xff] %vm2555, %v2112
      %2724 = vst.msk [vmem:[%s179 + $0x540] sm:$0xff] %vm2555, %v2117
      %2725 = vst.msk [vmem:[%s179 + $0x548] sm:$0xff] %vm2555, %v2122
      %2726 = vst.msk [vmem:[%s179 + $0x550] sm:$0xff] %vm2555, %v2127
      %2727 = vst.msk [vmem:[%s179 + $0x558] sm:$0xff] %vm2555, %v2132
      %2728 = vst.msk [vmem:[%s179 + $0x560] sm:$0xff] %vm2555, %v2137
      %2729 = vst.msk [vmem:[%s179 + $0x568] sm:$0xff] %vm2555, %v2142
      %2730 = vst.msk [vmem:[%s179 + $0x570] sm:$0xff] %vm2555, %v2147
      %2731 = vst.msk [vmem:[%s179 + $0x578] sm:$0xff] %vm2555, %v2152
      %2732 = vst.msk [vmem:[%s179 + $0x580] sm:$0xff] %vm2555, %v2157
      %2733 = vst.msk [vmem:[%s179 + $0x588] sm:$0xff] %vm2555, %v2162
      %2734 = vst.msk [vmem:[%s179 + $0x590] sm:$0xff] %vm2555, %v2167
      %2735 = vst.msk [vmem:[%s179 + $0x598] sm:$0xff] %vm2555, %v2172
      %2736 = vst.msk [vmem:[%s179 + $0x5a0] sm:$0xff] %vm2555, %v2177
      %2737 = vst.msk [vmem:[%s179 + $0x5a8] sm:$0xff] %vm2555, %v2182
      %2738 = vst.msk [vmem:[%s179 + $0x5b0] sm:$0xff] %vm2555, %v2187
      %2739 = vst.msk [vmem:[%s179 + $0x5b8] sm:$0xff] %vm2555, %v2192
      %2740 = vst.msk [vmem:[%s179 + $0x5c0] sm:$0xff] %vm2555, %v2197
      %2741 = vst.msk [vmem:[%s179 + $0x5c8] sm:$0xff] %vm2555, %v2202
      %2742 = vst.msk [vmem:[%s179 + $0x5d0] sm:$0xff] %vm2555, %v2207
      %2743 = vst.msk [vmem:[%s179 + $0x5d8] sm:$0xff] %vm2555, %v2212
      %2744 = vst.msk [vmem:[%s179 + $0x5e0] sm:$0xff] %vm2555, %v2217
      %2745 = vst.msk [vmem:[%s179 + $0x5e8] sm:$0xff] %vm2555, %v2222
      %2746 = vst.msk [vmem:[%s179 + $0x5f0] sm:$0xff] %vm2555, %v2227
      %2747 = vst.msk [vmem:[%s179 + $0x5f8] sm:$0xff] %vm2555, %v2232
      %2748 = vst.msk [vmem:[%s179 + $0x600] sm:$0xff] %vm2555, %v2237
      %2749 = vst.msk [vmem:[%s179 + $0x608] sm:$0xff] %vm2555, %v2242
      %2750 = vst.msk [vmem:[%s179 + $0x610] sm:$0xff] %vm2555, %v2247
      %2751 = vst.msk [vmem:[%s179 + $0x618] sm:$0xff] %vm2555, %v2252
      %2752 = vst.msk [vmem:[%s179 + $0x620] sm:$0xff] %vm2555, %v2257
      %2753 = vst.msk [vmem:[%s179 + $0x628] sm:$0xff] %vm2555, %v2262
      %2754 = vst.msk [vmem:[%s179 + $0x630] sm:$0xff] %vm2555, %v2267
      %2755 = vst.msk [vmem:[%s179 + $0x638] sm:$0xff] %vm2555, %v2272
      %2756 = vst.msk [vmem:[%s179 + $0x640] sm:$0xff] %vm2555, %v2277
      %2757 = vst.msk [vmem:[%s179 + $0x648] sm:$0xff] %vm2555, %v2282
      %2758 = vst.msk [vmem:[%s179 + $0x650] sm:$0xff] %vm2555, %v2287
      %2759 = vst.msk [vmem:[%s179 + $0x658] sm:$0xff] %vm2555, %v2292
      %2760 = vst.msk [vmem:[%s179 + $0x660] sm:$0xff] %vm2555, %v2297
      %2761 = vst.msk [vmem:[%s179 + $0x668] sm:$0xff] %vm2555, %v2302
      %2762 = vst.msk [vmem:[%s179 + $0x670] sm:$0xff] %vm2555, %v2307
      %2763 = vst.msk [vmem:[%s179 + $0x678] sm:$0xff] %vm2555, %v2312
      %2764 = vst.msk [vmem:[%s179 + $0x680] sm:$0xff] %vm2555, %v2317
      %2765 = vst.msk [vmem:[%s179 + $0x688] sm:$0xff] %vm2555, %v2322
      %2766 = vst.msk [vmem:[%s179 + $0x690] sm:$0xff] %vm2555, %v2327
      %2767 = vst.msk [vmem:[%s179 + $0x698] sm:$0xff] %vm2555, %v2332
      %2768 = vst.msk [vmem:[%s179 + $0x6a0] sm:$0xff] %vm2555, %v2337
      %2769 = vst.msk [vmem:[%s179 + $0x6a8] sm:$0xff] %vm2555, %v2342
      %2770 = vst.msk [vmem:[%s179 + $0x6b0] sm:$0xff] %vm2555, %v2347
      %2771 = vst.msk [vmem:[%s179 + $0x6b8] sm:$0xff] %vm2555, %v2352
      %2772 = vst.msk [vmem:[%s179 + $0x6c0] sm:$0xff] %vm2555, %v2357
      %2773 = vst.msk [vmem:[%s179 + $0x6c8] sm:$0xff] %vm2555, %v2362
      %2774 = vst.msk [vmem:[%s179 + $0x6d0] sm:$0xff] %vm2555, %v2367
      %2775 = vst.msk [vmem:[%s179 + $0x6d8] sm:$0xff] %vm2555, %v2372
      %2776 = vst.msk [vmem:[%s179 + $0x6e0] sm:$0xff] %vm2555, %v2377
      %2777 = vst.msk [vmem:[%s179 + $0x6e8] sm:$0xff] %vm2555, %v2382
      %2778 = vst.msk [vmem:[%s179 + $0x6f0] sm:$0xff] %vm2555, %v2387
      %2779 = vst.msk [vmem:[%s179 + $0x6f8] sm:$0xff] %vm2555, %v2392
      %2780 = vst.msk [vmem:[%s179 + $0x700] sm:$0xff] %vm2555, %v2397
      %2781 = vst.msk [vmem:[%s179 + $0x708] sm:$0xff] %vm2555, %v2402
      %2782 = vst.msk [vmem:[%s179 + $0x710] sm:$0xff] %vm2555, %v2407
      %2783 = vst.msk [vmem:[%s179 + $0x718] sm:$0xff] %vm2555, %v2412
      %2784 = vst.msk [vmem:[%s179 + $0x720] sm:$0xff] %vm2555, %v2417
      %2785 = vst.msk [vmem:[%s179 + $0x728] sm:$0xff] %vm2555, %v2422
      %2786 = vst.msk [vmem:[%s179 + $0x730] sm:$0xff] %vm2555, %v2427
      %2787 = vst.msk [vmem:[%s179 + $0x738] sm:$0xff] %vm2555, %v2432
      %2788 = vst.msk [vmem:[%s179 + $0x740] sm:$0xff] %vm2555, %v2437
      %2789 = vst.msk [vmem:[%s179 + $0x748] sm:$0xff] %vm2555, %v2442
      %2790 = vst.msk [vmem:[%s179 + $0x750] sm:$0xff] %vm2555, %v2447
      %2791 = vst.msk [vmem:[%s179 + $0x758] sm:$0xff] %vm2555, %v2452
      %2792 = vst.msk [vmem:[%s179 + $0x760] sm:$0xff] %vm2555, %v2457
      %2793 = vst.msk [vmem:[%s179 + $0x768] sm:$0xff] %vm2555, %v2462
      %2794 = vst.msk [vmem:[%s179 + $0x770] sm:$0xff] %vm2555, %v2467
      %2795 = vst.msk [vmem:[%s179 + $0x778] sm:$0xff] %vm2555, %v2472
      %2796 = vst.msk [vmem:[%s179 + $0x780] sm:$0xff] %vm2555, %v2477
      %2797 = vst.msk [vmem:[%s179 + $0x788] sm:$0xff] %vm2555, %v2482
      %2798 = vst.msk [vmem:[%s179 + $0x790] sm:$0xff] %vm2555, %v2487
      %2799 = vst.msk [vmem:[%s179 + $0x798] sm:$0xff] %vm2555, %v2492
      %2800 = vst.msk [vmem:[%s179 + $0x7a0] sm:$0xff] %vm2555, %v2497
      %2801 = vst.msk [vmem:[%s179 + $0x7a8] sm:$0xff] %vm2555, %v2502
      %2802 = vst.msk [vmem:[%s179 + $0x7b0] sm:$0xff] %vm2555, %v2507
      %2803 = vst.msk [vmem:[%s179 + $0x7b8] sm:$0xff] %vm2555, %v2512
      %2804 = vst.msk [vmem:[%s179 + $0x7c0] sm:$0xff] %vm2555, %v2517
      %2805 = vst.msk [vmem:[%s179 + $0x7c8] sm:$0xff] %vm2555, %v2522
      %2806 = vst.msk [vmem:[%s179 + $0x7d0] sm:$0xff] %vm2555, %v2527
      %2807 = vst.msk [vmem:[%s179 + $0x7d8] sm:$0xff] %vm2555, %v2532
      %2808 = vst.msk [vmem:[%s179 + $0x7e0] sm:$0xff] %vm2555, %v2537
      %2809 = vst.msk [vmem:[%s179 + $0x7e8] sm:$0xff] %vm2555, %v2542
      %2810 = vst.msk [vmem:[%s179 + $0x7f0] sm:$0xff] %vm2555, %v2547
      %2811 = vst.msk [vmem:[%s179 + $0x7f8] sm:$0xff] %vm2555, %v2552
      %s2812 = smul.u32 256, %s20
      %p2813 = scmp.lt.s32.totalorder %s2812, 767
      %s2814 = scalar_select %p2813, %s2812, 767
      %s2815 = smul.addr %s2814, 8
      %s2816 = scalar_lea.vmem %s3, %s2815
      // Predicated region
      $region29: #{tpu_custom_call.1} parent=27 // pred_check
        %p2817 = pneg %p92
      $region30: #{tpu_custom_call.1} parent=27 // pred_check_branch
        %2819 = sbr.rel (%p2817) target = $region32
      $region31: #{tpu_custom_call.1} parent=27 // pred_region
        %s2820 = smul.u32 256, %s20
      $region32: #{tpu_custom_call.1} parent=27 // pred_fallthru
        _
    $region28: #{tpu_custom_call.1} parent=5 // pred_fallthru
      _
    %p2821 = scmp.le.s32.totalorder 2, %s15
    // Predicated region
    $region33: #{tpu_custom_call.1} parent=5 // pred_check
      %p2822 = pneg %p2821
    $region34: #{tpu_custom_call.1} parent=5 // pred_check_branch
      %2824 = sbr.rel (%p2822) target = $region36
    $region35: #{tpu_custom_call.1} parent=5 // pred_region
      %s2825 = ssub.s32 %s15, 2
      // Predicated region
      $region37: #{tpu_custom_call.1} parent=35 // pred_check
        %p2826 = pneg %p98
      $region38: #{tpu_custom_call.1} parent=35 // pred_check_branch
        %2828 = sbr.rel (%p2826) target = $region40
      $region39: #{tpu_custom_call.1} parent=35 // pred_region
        %s2829 = smul.u32 256, %s21
        %p2830 = scmp.lt.s32.totalorder %s2829, 767
        %s2831 = scalar_select %p2830, %s2829, 767
        %s2832 = smul.addr %s2831, 8
        %s2833 = scalar_lea.vmem %s3, %s2832
      $region40: #{tpu_custom_call.1} parent=35 // pred_fallthru
        _
    $region36: #{tpu_custom_call.1} parent=5 // pred_fallthru
      _
  $region6: #{tpu_custom_call.1} parent=0 // loop_footer
    %s19 = sadd.s32 1, %s15
  $region7: #{tpu_custom_call.1} parent=0 // loop_footer_branch
    %14 = sbr.rel target = $region3
  $region8: #{tpu_custom_call.1} parent=0 // loop_exit
    _

</llo_original>
